<compile_context>
chip_gen: v5e
topology: v5e:2x2
jax: 0.10.0
libtpu: 0.0.40
codegen_flags: <defaults>
</compile_context>

<pallas_src>
import jax
import jax.numpy as jnp
from jax import lax
from jax.experimental import pallas as pl
from jax.experimental.pallas import tpu as pltpu


# ---------------------------------------------------------------------------
# Fused kernel: encoder + all GIN layers + pool + predictor
# ---------------------------------------------------------------------------

def _fused_gnn_kernel(
    # constant inputs
    x_ref, wenc_ref, benc_ref,
    src_ref, dst_ref, attr_ref,
    # per-layer (stacked, selected by BlockSpec index_map on the layer grid)
    etab_ref, w1_ref, b1_ref, w2_ref, b2_ref, eps_ref,
    # pooling / predictor
    pmat_ref, invc_ref, wp1_ref, bp1_ref, wp2_ref, bp2_ref,
    # outputs
    out_ref,
    # scratch carried across the layer grid axis
    h_sc, hb_sc, gmask_sc, smask_sc, onehot_sc,
):
    layer = pl.program_id(0)
    num_layer = pl.num_programs(0)

    n_pad, d_pad = h_sc.shape
    e_pad = gmask_sc.shape[0]
    et_rows = onehot_sc.shape[1]

    # ---- layer 0: node encoder + layer-invariant masks (built once) ----
    @pl.when(layer == 0)
    def _():
        # h0 = x @ Wenc + benc  (single lane-dense matmul; f32 for accuracy)
        h0 = jnp.dot(x_ref[...], wenc_ref[...],
                     preferred_element_type=jnp.float32) + benc_ref[...]
        h_sc[...] = h0
        hb_sc[...] = h0.astype(jnp.bfloat16)

        src = src_ref[...]                              # (E, 1) int32
        dst = dst_ref[...]                              # (1, E) int32
        attr = attr_ref[...]                            # (E, 1) int32
        # gather mask: gmask[e, n] = (n == src[e]); built directly in bf16
        e_iota = lax.broadcasted_iota(jnp.int32, (e_pad, n_pad), 1)
        gmask_sc[...] = (e_iota == src).astype(jnp.bfloat16)
        # scatter mask, already [N, E] oriented: smask[n, e] = (n == dst[e])
        n_iota = lax.broadcasted_iota(jnp.int32, (n_pad, e_pad), 0)
        smask_sc[...] = (n_iota == dst).astype(jnp.bfloat16)
        # edge-type one-hot (pad edges carry attr = -1 -> all-zero row)
        t_iota = lax.broadcasted_iota(jnp.int32, (e_pad, et_rows), 1)
        onehot_sc[...] = (t_iota == attr).astype(jnp.bfloat16)

    # ---- GIN conv for this layer ----
    h = h_sc[...]                                       # (N, Dp) f32
    h_b = hb_sc[...]                                    # (N, Dp) bf16

    # edge-type embedding: one MXU matmul against the precomputed one-hot
    emb = jnp.dot(onehot_sc[...], etab_ref[...],
                  preferred_element_type=jnp.float32)

    # gather source rows: xj[e, :] = h[src[e], :]
    xj = jnp.dot(gmask_sc[...], h_b, preferred_element_type=jnp.float32)

    # GIN message, then scatter-add over destinations (edge axis contracted
    # directly by a standard matmul; no transpose).
    msg = jnp.maximum(xj + emb, 0.0).astype(jnp.bfloat16)
    agg = jnp.dot(smask_sc[...], msg, preferred_element_type=jnp.float32)

    # (1 + eps) * x + aggr, then the GIN MLP (BatchNorms pre-folded into W/b).
    pre = (1.0 + eps_ref[...]) * h + agg
    z1 = jnp.dot(pre.astype(jnp.bfloat16), w1_ref[...],
                 preferred_element_type=jnp.float32) + b1_ref[...]
    z1 = jnp.maximum(z1, 0.0)
    z2 = jnp.dot(z1.astype(jnp.bfloat16), w2_ref[...],
                 preferred_element_type=jnp.float32) + b2_ref[...]
    # Dropout = identity (eval); ReLU on all but the last layer; residual.

    @pl.when(layer != num_layer - 1)
    def _():
        h_new = jnp.maximum(z2, 0.0) + h
        h_sc[...] = h_new
        hb_sc[...] = h_new.astype(jnp.bfloat16)

    @pl.when(layer == num_layer - 1)
    def _():
        h_last = z2 + h
        # global mean pool (0/1 bf16 membership @ h, then 1/count scale)
        hg = jnp.dot(pmat_ref[...], h_last.astype(jnp.bfloat16),
                     preferred_element_type=jnp.float32) * invc_ref[...]
        # predictor MLP (predictor BN folded into wp1/bp1); Dropout = identity.
        zp = jnp.dot(hg.astype(jnp.bfloat16), wp1_ref[...],
                     preferred_element_type=jnp.float32) + bp1_ref[...]
        zp = jnp.maximum(zp, 0.0)
        out_ref[...] = jnp.dot(zp.astype(jnp.bfloat16), wp2_ref[...],
                               preferred_element_type=jnp.float32) + bp2_ref[...]


# ---------------------------------------------------------------------------
# BlockSpec helpers
# ---------------------------------------------------------------------------

def _const_spec(shape):
    """Whole array resident in VMEM, same block for every layer step."""
    zeros = (0,) * len(shape)
    return pl.BlockSpec(tuple(shape), lambda l: zeros)


def _layer_spec(shape):
    """Stacked-per-layer array: leading layer axis squeezed, block l selected."""
    zeros = (0,) * len(shape)
    return pl.BlockSpec((None,) + tuple(shape), lambda l: (l,) + zeros)


def _nbytes(a):
    return int(a.size) * a.dtype.itemsize


def _vmem_cap_bytes():
    """Generation-aware physical VMEM (v5e/v6e: 128 MiB, v7x: 64 MiB per TC)."""
    try:
        return int(pltpu.get_tpu_info().vmem_capacity_bytes)
    except Exception:
        return 64 << 20      # conservative fallback = smallest (v7x per-TC)


# ---------------------------------------------------------------------------
# Parameters: torch-style init, then BN-fold + lane-pad + bf16 pack
# ---------------------------------------------------------------------------

def _round_up(x, m):
    return ((x + m - 1) // m) * m


def _bn_params(dim, eps=1e-5):
    # torch BatchNorm1d defaults: weight=1, bias=0, running_mean=0, running_var=1
    return {
        "weight": jnp.ones((dim,), jnp.float32),
        "bias": jnp.zeros((dim,), jnp.float32),
        "running_mean": jnp.zeros((dim,), jnp.float32),
        "running_var": jnp.ones((dim,), jnp.float32),
        "eps": eps,
    }


def _fold_bn(w, b, bn):
    """Fold eval-mode BatchNorm1d into the preceding Linear (exact)."""
    scale = bn["weight"] / jnp.sqrt(bn["running_var"] + bn["eps"])
    w_f = w * scale[None, :]
    b_f = (b - bn["running_mean"]) * scale + bn["bias"]
    return w_f, b_f


def init_params(key, *, emb_dim, num_layer, num_tasks, num_edge_types, in_feat=4):
    keys = jax.random.split(key, 4 + 5 * num_layer + 4)
    it = iter(keys)

    def rnd(shape):
        return (0.1 * jax.random.normal(next(it), shape)).astype(jnp.float32)

    params = {
        "node_enc_w": rnd((in_feat, emb_dim)),
        "node_enc_b": rnd((emb_dim,)),
        "gin_layers": [],
    }
    for _ in range(num_layer):
        params["gin_layers"].append({
            "edge_table": rnd((num_edge_types, emb_dim)),
            "w1": rnd((emb_dim, 2 * emb_dim)),
            "b1": rnd((2 * emb_dim,)),
            "bn1": _bn_params(2 * emb_dim),
            "w2": rnd((2 * emb_dim, emb_dim)),
            "b2": jnp.zeros((emb_dim,), jnp.float32),
            "bn_out": _bn_params(emb_dim),
            "eps": jnp.zeros((), jnp.float32),      # torch GINConv eps init = 0
        })
    params["pred"] = {
        "w1": rnd((emb_dim, 2 * emb_dim)),
        "b1": rnd((2 * emb_dim,)),
        "bn": _bn_params(2 * emb_dim),
        "w2": rnd((2 * emb_dim, num_tasks)),
        "b2": jnp.zeros((num_tasks,), jnp.float32),
    }
    return params


def pack_params(params, *, lane=128):
    """BN-fold, zero-pad feature dims to the 128-lane width, stack per-layer
    weights along a leading layer axis, and cast matmul weights to bf16."""
    num_layer = len(params["gin_layers"])
    emb_dim = params["node_enc_w"].shape[1]
    hid_dim = params["gin_layers"][0]["w1"].shape[1]
    pred_hid = params["pred"]["w1"].shape[1]
    num_tasks = params["pred"]["w2"].shape[1]
    in_feat = params["node_enc_w"].shape[0]
    num_edge_types = params["gin_layers"][0]["edge_table"].shape[0]

    d_pad = _round_up(emb_dim, lane)
    h_pad = _round_up(hid_dim, lane)
    p_pad = _round_up(pred_hid, lane)
    t_pad = _round_up(num_tasks, lane)
    i_pad = _round_up(in_feat, lane)
    et_pad = _round_up(num_edge_types, lane)     # lane-dense one-hot contraction

    def pad2(a, rows, cols, dtype):
        out = jnp.zeros((rows, cols), jnp.float32)
        out = out.at[: a.shape[0], : a.shape[1]].set(a.astype(jnp.float32))
        return out.astype(dtype)

    etab, w1s, b1s, w2s, b2s, epss = [], [], [], [], [], []
    for lp in params["gin_layers"]:
        etab.append(pad2(lp["edge_table"], et_pad, d_pad, jnp.bfloat16))
        w1f, b1f = _fold_bn(lp["w1"], lp["b1"], lp["bn1"])
        w2f, b2f = _fold_bn(lp["w2"], lp["b2"], lp["bn_out"])
        w1s.append(pad2(w1f, d_pad, h_pad, jnp.bfloat16))
        b1s.append(pad2(b1f.reshape(1, -1), 1, h_pad, jnp.float32))
        w2s.append(pad2(w2f, h_pad, d_pad, jnp.bfloat16))
        b2s.append(pad2(b2f.reshape(1, -1), 1, d_pad, jnp.float32))
        epss.append(lp["eps"].reshape(1, 1, 1).astype(jnp.float32))

    pr = params["pred"]
    wp1f, bp1f = _fold_bn(pr["w1"], pr["b1"], pr["bn"])

    return {
        "wenc": pad2(params["node_enc_w"], i_pad, d_pad, jnp.float32),
        "benc": pad2(params["node_enc_b"].reshape(1, -1), 1, d_pad, jnp.float32),
        "etab": jnp.stack(etab),                    # (L, ETp, Dp) bf16
        "w1": jnp.stack(w1s),                       # (L, Dp, Hp)  bf16
        "b1": jnp.stack(b1s),                       # (L, 1, Hp)   f32
        "w2": jnp.stack(w2s),                       # (L, Hp, Dp)  bf16
        "b2": jnp.stack(b2s),                       # (L, 1, Dp)   f32
        "eps": jnp.concatenate(epss, axis=0),       # (L, 1, 1)    f32
        "wp1": pad2(wp1f, d_pad, p_pad, jnp.bfloat16),
        "bp1": pad2(bp1f.reshape(1, -1), 1, p_pad, jnp.float32),
        "wp2": pad2(pr["w2"], p_pad, t_pad, jnp.bfloat16),
        "bp2": pad2(pr["b2"].reshape(1, -1), 1, t_pad, jnp.float32),
        "dims": {"d_pad": d_pad, "h_pad": h_pad, "p_pad": p_pad, "t_pad": t_pad,
                 "i_pad": i_pad, "et_pad": et_pad,
                 "num_layer": num_layer, "num_tasks": num_tasks},
    }


# ---------------------------------------------------------------------------
# Forward pass: one fused pallas_call
# ---------------------------------------------------------------------------

def spmotifnet_gnn_forward(packed, x, edge_index, edge_attr, batch, *, num_graphs):
    dims = packed["dims"]
    d_pad, h_pad, p_pad, t_pad = (dims["d_pad"], dims["h_pad"],
                                  dims["p_pad"], dims["t_pad"])
    i_pad, et_pad = dims["i_pad"], dims["et_pad"]
    num_layer = dims["num_layer"]
    num_tasks = dims["num_tasks"]

    n_nodes = x.shape[0]
    n_edges = edge_index.shape[1]
    # Pad node / edge counts to 128 so every mask and matmul contraction is
    # lane-dense and unmasked; pad rows/cols contribute exactly zero.
    n_pad = _round_up(n_nodes, 128)
    e_pad = _round_up(n_edges, 128)

    # node features, zero-padded to (n_pad, i_pad) -> lane-dense encoder matmul
    x_p = jnp.zeros((n_pad, i_pad), jnp.float32)
    x_p = x_p.at[:n_nodes, : x.shape[1]].set(x.astype(jnp.float32))

    # padded edge lists: dummy edges use src = dst = attr = -1 (zero mask rows)
    pad_e = e_pad - n_edges
    src = jnp.concatenate([edge_index[0].astype(jnp.int32),
                           jnp.full((pad_e,), -1, jnp.int32)])
    dst = jnp.concatenate([edge_index[1].astype(jnp.int32),
                           jnp.full((pad_e,), -1, jnp.int32)])
    attr = jnp.concatenate([edge_attr.astype(jnp.int32),
                            jnp.full((pad_e,), -1, jnp.int32)])
    src_col = src.reshape(e_pad, 1)
    dst_row = dst.reshape(1, e_pad)
    attr_col = attr.reshape(e_pad, 1)

    # pooling membership; padded nodes get batch = -1 so they are excluded
    batch_p = jnp.concatenate([batch.astype(jnp.int32),
                               jnp.full((n_pad - n_nodes,), -1, jnp.int32)])
    gids = jnp.arange(num_graphs, dtype=jnp.int32)
    member = batch_p[None, :] == gids[:, None]                       # (G, Np)
    pmat = member.astype(jnp.bfloat16)                               # 0/1 exact
    counts = jnp.maximum(member.sum(axis=1).astype(jnp.float32), 1.0)
    invc = (1.0 / counts).reshape(num_graphs, 1)

    operands = (
        x_p, packed["wenc"], packed["benc"],
        src_col, dst_row, attr_col,
        packed["etab"], packed["w1"], packed["b1"], packed["w2"], packed["b2"],
        packed["eps"],
        pmat, invc, packed["wp1"], packed["bp1"], packed["wp2"], packed["bp2"],
    )
    in_specs = [
        _const_spec(x_p.shape), _const_spec(packed["wenc"].shape),
        _const_spec(packed["benc"].shape),
        _const_spec(src_col.shape), _const_spec(dst_row.shape),
        _const_spec(attr_col.shape),
        _layer_spec(packed["etab"].shape[1:]), _layer_spec(packed["w1"].shape[1:]),
        _layer_spec(packed["b1"].shape[1:]), _layer_spec(packed["w2"].shape[1:]),
        _layer_spec(packed["b2"].shape[1:]), _layer_spec(packed["eps"].shape[1:]),
        _const_spec(pmat.shape), _const_spec(invc.shape),
        _const_spec(packed["wp1"].shape), _const_spec(packed["bp1"].shape),
        _const_spec(packed["wp2"].shape), _const_spec(packed["bp2"].shape),
    ]
    out_spec = _const_spec((num_graphs, t_pad))

    # Layer-invariant masks / one-hot / h live in VMEM scratch (built at layer 0).
    scratch_shapes = [
        pltpu.VMEM((n_pad, d_pad), jnp.float32),     # h  (f32 residual path)
        pltpu.VMEM((n_pad, d_pad), jnp.bfloat16),    # h  (bf16 MXU operand)
        pltpu.VMEM((e_pad, n_pad), jnp.bfloat16),    # gather mask
        pltpu.VMEM((n_pad, e_pad), jnp.bfloat16),    # scatter mask
        pltpu.VMEM((e_pad, et_pad), jnp.bfloat16),   # edge-type one-hot
    ]

    # Roofline hints for the scheduler.
    flops = (num_layer * (2 * e_pad * et_pad * d_pad        # edge embedding
                          + 2 * e_pad * n_pad * d_pad       # gather
                          + 2 * n_pad * e_pad * d_pad       # scatter
                          + 2 * n_pad * d_pad * h_pad
                          + 2 * n_pad * h_pad * d_pad)
             + 2 * n_pad * i_pad * d_pad                    # encoder
             + 2 * num_graphs * n_pad * d_pad               # pool
             + 2 * num_graphs * d_pad * p_pad
             + 2 * num_graphs * p_pad * t_pad)
    bytes_accessed = sum(_nbytes(o) for o in operands) + num_graphs * t_pad * 4

    # Explicit scoped-VMEM budget from the actual footprint, capped at 75% of
    # the queried physical VMEM (generation-aware: ~48 MiB v7x, ~96 MiB v5e/v6e).
    layer_bytes = sum(_nbytes(packed[k])
                      for k in ("etab", "w1", "b1", "w2", "b2", "eps")) // num_layer
    const_bytes = sum(_nbytes(o) for o in operands) - num_layer * layer_bytes
    scratch_bytes = (n_pad * d_pad * (4 + 2)                 # h f32 + bf16
                     + 2 * n_pad * e_pad * 2                 # gather + scatter masks
                     + e_pad * et_pad * 2)                   # one-hot
    inter_bytes = (3 * e_pad * d_pad * 4                     # emb / xj / msg
                   + 6 * n_pad * max(d_pad, h_pad) * 4)      # pre / z1 / z2 / temps
    vmem_need = (2 * 2 * layer_bytes + const_bytes + 2 * num_graphs * t_pad * 4
                 + scratch_bytes + inter_bytes + (2 << 20))
    vmem_limit = int(max(16 << 20, min(vmem_need, int(0.75 * _vmem_cap_bytes()))))

    pred_pad = pl.pallas_call(
        _fused_gnn_kernel,
        out_shape=jax.ShapeDtypeStruct((num_graphs, t_pad), jnp.float32),
        grid=(num_layer,),
        in_specs=in_specs,
        out_specs=out_spec,
        scratch_shapes=scratch_shapes,
        compiler_params=pltpu.CompilerParams(
            dimension_semantics=("arbitrary",),      # h carries across layers
            vmem_limit_bytes=vmem_limit,
        ),
        cost_estimate=pl.CostEstimate(flops=int(flops), transcendentals=0,
                                      bytes_accessed=int(bytes_accessed)),
    )(*operands)

    return {"pred_rem": pred_pad[:, :num_tasks]}


# ---------------------------------------------------------------------------
# Pure-JAX reference (f32, unfolded, unpadded) for a loose self-check
# ---------------------------------------------------------------------------

def _reference_forward(params, x, edge_index, edge_attr, batch, *, num_graphs):
    def bn_eval(v, bn):
        return ((v - bn["running_mean"]) / jnp.sqrt(bn["running_var"] + bn["eps"])
                * bn["weight"] + bn["bias"])

    h = x @ params["node_enc_w"] + params["node_enc_b"]
    src, dst = edge_index[0], edge_index[1]
    num_layer = len(params["gin_layers"])
    for li, lp in enumerate(params["gin_layers"]):
        emb = lp["edge_table"][edge_attr]
        msg = jax.nn.relu(h[src] + emb)
        agg = jnp.zeros_like(h).at[dst].add(msg)
        pre = (1.0 + lp["eps"]) * h + agg
        z1 = jax.nn.relu(bn_eval(pre @ lp["w1"] + lp["b1"], lp["bn1"]))
        z2 = z1 @ lp["w2"] + lp["b2"]
        out = bn_eval(z2, lp["bn_out"])
        if li != num_layer - 1:
            out = jax.nn.relu(out)
        h = out + h
    member = (batch[None, :] == jnp.arange(num_graphs)[:, None]).astype(jnp.float32)
    hg = (member @ h) / jnp.maximum(member.sum(axis=1, keepdims=True), 1.0)
    pr = params["pred"]
    z = jax.nn.relu(bn_eval(hg @ pr["w1"] + pr["b1"], pr["bn"]))
    return z @ pr["w2"] + pr["b2"]


# ---------------------------------------------------------------------------
# Main
# ---------------------------------------------------------------------------

if __name__ == "__main__":
    EMB_DIM = 32
    NUM_LAYER = 2              # module requires >= 2; kept small for the demo
    NUM_TASKS = 3
    NUM_EDGE_TYPES = 3
    NODES_PER_GRAPH = 12
    NUM_GRAPHS = 2
    N = NODES_PER_GRAPH * NUM_GRAPHS

    key = jax.random.PRNGKey(0)
    k_x, k_attr, k_params = jax.random.split(key, 3)

    # node features x: [N, 4]
    x = jax.random.normal(k_x, (N, 4), dtype=jnp.float32)
    batch = jnp.repeat(jnp.arange(NUM_GRAPHS, dtype=jnp.int32), NODES_PER_GRAPH)

    # bidirectional ring edges within each graph
    src_list, dst_list = [], []
    for g in range(NUM_GRAPHS):
        base = g * NODES_PER_GRAPH
        for i in range(NODES_PER_GRAPH):
            a = base + i
            b = base + (i + 1) % NODES_PER_GRAPH
            src_list += [a, b]
            dst_list += [b, a]
    edge_index = jnp.array([src_list, dst_list], dtype=jnp.int32)   # [2, E]
    E = edge_index.shape[1]
    edge_attr = jax.random.randint(k_attr, (E,), 0, NUM_EDGE_TYPES, dtype=jnp.int32)

    params = init_params(k_params, emb_dim=EMB_DIM, num_layer=NUM_LAYER,
                         num_tasks=NUM_TASKS, num_edge_types=NUM_EDGE_TYPES)
    packed = pack_params(params)

    # TODO(synk): training-mode dropout (drop_ratio=0.5) has no deterministic
    # equivalent here; eval-mode (identity) semantics are implemented.
    out = spmotifnet_gnn_forward(packed, x, edge_index, edge_attr, batch,
                                 num_graphs=NUM_GRAPHS)
    pred = jax.block_until_ready(out["pred_rem"])

    assert pred.shape == (NUM_GRAPHS, NUM_TASKS)
    assert bool(jnp.all(jnp.isfinite(pred)))

    ref = _reference_forward(params, x, edge_index, edge_attr, batch,
                             num_graphs=NUM_GRAPHS)
    # loose tolerance: kernel uses bf16 MXU operands with f32 accumulation
    assert bool(jnp.allclose(pred, ref, atol=5e-2, rtol=5e-2))

    print("KERNEL_OK")
</pallas_src>

<mosaic_0001>
module attributes {stable_mosaic.version = 11 : i64} {
  func.func @_fused_gnn_kernel(%arg0: i32, %arg1: memref<128x128xf32, #tpu.memory_space<vmem>>, %arg2: memref<128x128xf32, #tpu.memory_space<vmem>>, %arg3: memref<1x128xf32, #tpu.memory_space<vmem>>, %arg4: memref<128x1xi32, #tpu.memory_space<vmem>>, %arg5: memref<1x128xi32, #tpu.memory_space<vmem>>, %arg6: memref<128x1xi32, #tpu.memory_space<vmem>>, %arg7: memref<1x128x128xbf16, #tpu.memory_space<vmem>>, %arg8: memref<1x128x128xbf16, #tpu.memory_space<vmem>>, %arg9: memref<1x1x128xf32, #tpu.memory_space<vmem>>, %arg10: memref<1x128x128xbf16, #tpu.memory_space<vmem>>, %arg11: memref<1x1x128xf32, #tpu.memory_space<vmem>>, %arg12: memref<1x1x1xf32, #tpu.memory_space<vmem>>, %arg13: memref<2x128xbf16, #tpu.memory_space<vmem>>, %arg14: memref<2x1xf32, #tpu.memory_space<vmem>>, %arg15: memref<128x128xbf16, #tpu.memory_space<vmem>>, %arg16: memref<1x128xf32, #tpu.memory_space<vmem>>, %arg17: memref<128x128xbf16, #tpu.memory_space<vmem>>, %arg18: memref<1x128xf32, #tpu.memory_space<vmem>>, %arg19: memref<2x128xf32, #tpu.memory_space<vmem>>, %arg20: memref<128x128xf32, #tpu.memory_space<vmem>>, %arg21: memref<128x128xbf16, #tpu.memory_space<vmem>>, %arg22: memref<128x128xbf16, #tpu.memory_space<vmem>>, %arg23: memref<128x128xbf16, #tpu.memory_space<vmem>>, %arg24: memref<128x128xbf16, #tpu.memory_space<vmem>>) attributes {dimension_semantics = [#tpu.dimension_semantics<arbitrary>], iteration_bounds = array<i64: 2>, scalar_prefetch = 0 : i64, scratch_operands = 5 : i64, tpu.core_type = #tpu.core_type<tc>, window_params = [{pipeline_mode = #tpu.pipeline_mode<synchronous>, transform_indices = @transform_0, window_bounds = array<i64: 128, 128>}, {pipeline_mode = #tpu.pipeline_mode<synchronous>, transform_indices = @transform_1, window_bounds = array<i64: 128, 128>}, {pipeline_mode = #tpu.pipeline_mode<synchronous>, transform_indices = @transform_2, window_bounds = array<i64: 1, 128>}, {pipeline_mode = #tpu.pipeline_mode<synchronous>, transform_indices = @transform_3, window_bounds = array<i64: 128, 1>}, {pipeline_mode = #tpu.pipeline_mode<synchronous>, transform_indices = @transform_4, window_bounds = array<i64: 1, 128>}, {pipeline_mode = #tpu.pipeline_mode<synchronous>, transform_indices = @transform_5, window_bounds = array<i64: 128, 1>}, {transform_indices = @transform_6, window_bounds = array<i64: 1, 128, 128>}, {transform_indices = @transform_7, window_bounds = array<i64: 1, 128, 128>}, {transform_indices = @transform_8, window_bounds = array<i64: 1, 1, 128>}, {transform_indices = @transform_9, window_bounds = array<i64: 1, 128, 128>}, {transform_indices = @transform_10, window_bounds = array<i64: 1, 1, 128>}, {transform_indices = @transform_11, window_bounds = array<i64: 1, 1, 1>}, {pipeline_mode = #tpu.pipeline_mode<synchronous>, transform_indices = @transform_12, window_bounds = array<i64: 2, 128>}, {pipeline_mode = #tpu.pipeline_mode<synchronous>, transform_indices = @transform_13, window_bounds = array<i64: 2, 1>}, {pipeline_mode = #tpu.pipeline_mode<synchronous>, transform_indices = @transform_14, window_bounds = array<i64: 128, 128>}, {pipeline_mode = #tpu.pipeline_mode<synchronous>, transform_indices = @transform_15, window_bounds = array<i64: 1, 128>}, {pipeline_mode = #tpu.pipeline_mode<synchronous>, transform_indices = @transform_16, window_bounds = array<i64: 128, 128>}, {pipeline_mode = #tpu.pipeline_mode<synchronous>, transform_indices = @transform_17, window_bounds = array<i64: 1, 128>}, {pipeline_mode = #tpu.pipeline_mode<synchronous>, transform_indices = @transform_18, window_bounds = array<i64: 2, 128>}]} {
    %c0_i32 = arith.constant 0 : i32
    %0 = arith.cmpi eq, %arg0, %c0_i32 : i32
    %1 = arith.extui %0 : i1 to i32
    %c0_i32_0 = arith.constant 0 : i32
    %2 = arith.cmpi ne, %1, %c0_i32_0 : i32
    scf.if %2 {
      %c0_38 = arith.constant 0 : index
      %c0_39 = arith.constant 0 : index
      %48 = vector.load %arg1[%c0_38, %c0_39] : memref<128x128xf32, #tpu.memory_space<vmem>>, vector<128x128xf32>
      %c0_40 = arith.constant 0 : index
      %c0_41 = arith.constant 0 : index
      %49 = vector.load %arg2[%c0_40, %c0_41] : memref<128x128xf32, #tpu.memory_space<vmem>>, vector<128x128xf32>
      %cst_42 = arith.constant dense<0.000000e+00> : vector<128x128xf32>
      %50 = tpu.matmul %48, %49, %cst_42 {dimension_numbers = #tpu.dot_dimension_numbers<[1], [0], [0], [1], [0, 0, 1, 1], [], []>} : vector<128x128xf32>, vector<128x128xf32>, vector<128x128xf32> -> vector<128x128xf32>
      %c0_43 = arith.constant 0 : index
      %c0_44 = arith.constant 0 : index
      %51 = vector.load %arg3[%c0_43, %c0_44] : memref<1x128xf32, #tpu.memory_space<vmem>>, vector<1x128xf32>
      %52 = vector.broadcast %51 : vector<1x128xf32> to vector<128x128xf32>
      %53 = arith.addf %50, %52 : vector<128x128xf32>
      %c0_45 = arith.constant 0 : index
      %c0_46 = arith.constant 0 : index
      %54 = vector.load %arg20[%c0_45, %c0_46] : memref<128x128xf32, #tpu.memory_space<vmem>>, vector<128x128xf32>
      tpu.vector_store %arg20[%c0_45, %c0_46], %53 {strides = array<i32>} : memref<128x128xf32, #tpu.memory_space<vmem>>, vector<128x128xf32>,
      %55 = arith.truncf %53 : vector<128x128xf32> to vector<128x128xbf16>
      %c0_47 = arith.constant 0 : index
      %c0_48 = arith.constant 0 : index
      %56 = vector.load %arg21[%c0_47, %c0_48] : memref<128x128xbf16, #tpu.memory_space<vmem>>, vector<128x128xbf16>
      tpu.vector_store %arg21[%c0_47, %c0_48], %55 {strides = array<i32>} : memref<128x128xbf16, #tpu.memory_space<vmem>>, vector<128x128xbf16>,
      %c0_49 = arith.constant 0 : index
      %c0_50 = arith.constant 0 : index
      %57 = vector.load %arg4[%c0_49, %c0_50] : memref<128x1xi32, #tpu.memory_space<vmem>>, vector<128x1xi32>
      %c0_51 = arith.constant 0 : index
      %c0_52 = arith.constant 0 : index
      %58 = vector.load %arg5[%c0_51, %c0_52] : memref<1x128xi32, #tpu.memory_space<vmem>>, vector<1x128xi32>
      %c0_53 = arith.constant 0 : index
      %c0_54 = arith.constant 0 : index
      %59 = vector.load %arg6[%c0_53, %c0_54] : memref<128x1xi32, #tpu.memory_space<vmem>>, vector<128x1xi32>
      %60 = tpu.iota {dimensions = array<i32: 1>} : vector<128x128xi32>
      %61 = vector.broadcast %57 : vector<128x1xi32> to vector<128x128xi32>
      %62 = arith.cmpi eq, %60, %61 : vector<128x128xi32>
      %63 = arith.extui %62 : vector<128x128xi1> to vector<128x128xi32>
      %64 = arith.sitofp %63 : vector<128x128xi32> to vector<128x128xf32>
      %65 = arith.truncf %64 : vector<128x128xf32> to vector<128x128xbf16>
      %c0_55 = arith.constant 0 : index
      %c0_56 = arith.constant 0 : index
      %66 = vector.load %arg22[%c0_55, %c0_56] : memref<128x128xbf16, #tpu.memory_space<vmem>>, vector<128x128xbf16>
      tpu.vector_store %arg22[%c0_55, %c0_56], %65 {strides = array<i32>} : memref<128x128xbf16, #tpu.memory_space<vmem>>, vector<128x128xbf16>,
      %67 = tpu.iota {dimensions = array<i32: 0>} : vector<128x128xi32>
      %68 = vector.broadcast %58 : vector<1x128xi32> to vector<128x128xi32>
      %69 = arith.cmpi eq, %67, %68 : vector<128x128xi32>
      %70 = arith.extui %69 : vector<128x128xi1> to vector<128x128xi32>
      %71 = arith.sitofp %70 : vector<128x128xi32> to vector<128x128xf32>
      %72 = arith.truncf %71 : vector<128x128xf32> to vector<128x128xbf16>
      %c0_57 = arith.constant 0 : index
      %c0_58 = arith.constant 0 : index
      %73 = vector.load %arg23[%c0_57, %c0_58] : memref<128x128xbf16, #tpu.memory_space<vmem>>, vector<128x128xbf16>
      tpu.vector_store %arg23[%c0_57, %c0_58], %72 {strides = array<i32>} : memref<128x128xbf16, #tpu.memory_space<vmem>>, vector<128x128xbf16>,
      %74 = tpu.iota {dimensions = array<i32: 1>} : vector<128x128xi32>
      %75 = vector.broadcast %59 : vector<128x1xi32> to vector<128x128xi32>
      %76 = arith.cmpi eq, %74, %75 : vector<128x128xi32>
      %77 = arith.extui %76 : vector<128x128xi1> to vector<128x128xi32>
      %78 = arith.sitofp %77 : vector<128x128xi32> to vector<128x128xf32>
      %79 = arith.truncf %78 : vector<128x128xf32> to vector<128x128xbf16>
      %c0_59 = arith.constant 0 : index
      %c0_60 = arith.constant 0 : index
      %80 = vector.load %arg24[%c0_59, %c0_60] : memref<128x128xbf16, #tpu.memory_space<vmem>>, vector<128x128xbf16>
      tpu.vector_store %arg24[%c0_59, %c0_60], %79 {strides = array<i32>} : memref<128x128xbf16, #tpu.memory_space<vmem>>, vector<128x128xbf16>,
    } else {
    }
    %c0 = arith.constant 0 : index
    %c0_1 = arith.constant 0 : index
    %3 = vector.load %arg20[%c0, %c0_1] : memref<128x128xf32, #tpu.memory_space<vmem>>, vector<128x128xf32>
    %c0_2 = arith.constant 0 : index
    %c0_3 = arith.constant 0 : index
    %4 = vector.load %arg21[%c0_2, %c0_3] : memref<128x128xbf16, #tpu.memory_space<vmem>>, vector<128x128xbf16>
    %c0_4 = arith.constant 0 : index
    %c0_5 = arith.constant 0 : index
    %5 = vector.load %arg24[%c0_4, %c0_5] : memref<128x128xbf16, #tpu.memory_space<vmem>>, vector<128x128xbf16>
    %c0_6 = arith.constant 0 : index
    %c0_7 = arith.constant 0 : index
    %c0_8 = arith.constant 0 : index
    %6 = vector.load %arg7[%c0_6, %c0_7, %c0_8] : memref<1x128x128xbf16, #tpu.memory_space<vmem>>, vector<1x128x128xbf16>
    %7 = vector.shape_cast %6 : vector<1x128x128xbf16> to vector<128x128xbf16>
    %cst = arith.constant dense<0.000000e+00> : vector<128x128xf32>
    %8 = tpu.matmul %5, %7, %cst {dimension_numbers = #tpu.dot_dimension_numbers<[1], [0], [0], [1], [0, 0, 1, 1], [], []>} : vector<128x128xbf16>, vector<128x128xbf16>, vector<128x128xf32> -> vector<128x128xf32>
    %c0_9 = arith.constant 0 : index
    %c0_10 = arith.constant 0 : index
    %9 = vector.load %arg22[%c0_9, %c0_10] : memref<128x128xbf16, #tpu.memory_space<vmem>>, vector<128x128xbf16>
    %cst_11 = arith.constant dense<0.000000e+00> : vector<128x128xf32>
    %10 = tpu.matmul %9, %4, %cst_11 {dimension_numbers = #tpu.dot_dimension_numbers<[1], [0], [0], [1], [0, 0, 1, 1], [], []>} : vector<128x128xbf16>, vector<128x128xbf16>, vector<128x128xf32> -> vector<128x128xf32>
    %11 = arith.addf %10, %8 : vector<128x128xf32>
    %cst_12 = arith.constant 0.000000e+00 : f32
    %12 = vector.broadcast %cst_12 : f32 to vector<128x128xf32>
    %13 = arith.maximumf %11, %12 : vector<128x128xf32>
    %14 = arith.truncf %13 : vector<128x128xf32> to vector<128x128xbf16>
    %c0_13 = arith.constant 0 : index
    %c0_14 = arith.constant 0 : index
    %15 = vector.load %arg23[%c0_13, %c0_14] : memref<128x128xbf16, #tpu.memory_space<vmem>>, vector<128x128xbf16>
    %cst_15 = arith.constant dense<0.000000e+00> : vector<128x128xf32>
    %16 = tpu.matmul %15, %14, %cst_15 {dimension_numbers = #tpu.dot_dimension_numbers<[1], [0], [0], [1], [0, 0, 1, 1], [], []>} : vector<128x128xbf16>, vector<128x128xbf16>, vector<128x128xf32> -> vector<128x128xf32>
    %c0_16 = arith.constant 0 : index
    %c0_17 = arith.constant 0 : index
    %c0_18 = arith.constant 0 : index
    %17 = vector.load %arg12[%c0_16, %c0_17, %c0_18] : memref<1x1x1xf32, #tpu.memory_space<vmem>>, vector<1x1x1xf32>
    %18 = vector.shape_cast %17 : vector<1x1x1xf32> to vector<1x1xf32>
    %cst_19 = arith.constant 1.000000e+00 : f32
    %19 = vector.broadcast %cst_19 : f32 to vector<1x1xf32>
    %20 = arith.addf %19, %18 : vector<1x1xf32>
    %21 = vector.broadcast %20 : vector<1x1xf32> to vector<128x128xf32>
    %22 = arith.mulf %21, %3 : vector<128x128xf32>
    %23 = arith.addf %22, %16 : vector<128x128xf32>
    %24 = arith.truncf %23 : vector<128x128xf32> to vector<128x128xbf16>
    %c0_20 = arith.constant 0 : index
    %c0_21 = arith.constant 0 : index
    %c0_22 = arith.constant 0 : index
    %25 = vector.load %arg8[%c0_20, %c0_21, %c0_22] : memref<1x128x128xbf16, #tpu.memory_space<vmem>>, vector<1x128x128xbf16>
    %26 = vector.shape_cast %25 : vector<1x128x128xbf16> to vector<128x128xbf16>
    %cst_23 = arith.constant dense<0.000000e+00> : vector<128x128xf32>
    %27 = tpu.matmul %24, %26, %cst_23 {dimension_numbers = #tpu.dot_dimension_numbers<[1], [0], [0], [1], [0, 0, 1, 1], [], []>} : vector<128x128xbf16>, vector<128x128xbf16>, vector<128x128xf32> -> vector<128x128xf32>
    %c0_24 = arith.constant 0 : index
    %c0_25 = arith.constant 0 : index
    %c0_26 = arith.constant 0 : index
    %28 = vector.load %arg9[%c0_24, %c0_25, %c0_26] : memref<1x1x128xf32, #tpu.memory_space<vmem>>, vector<1x1x128xf32>
    %29 = vector.shape_cast %28 : vector<1x1x128xf32> to vector<1x128xf32>
    %30 = vector.broadcast %29 : vector<1x128xf32> to vector<128x128xf32>
    %31 = arith.addf %27, %30 : vector<128x128xf32>
    %cst_27 = arith.constant 0.000000e+00 : f32
    %32 = vector.broadcast %cst_27 : f32 to vector<128x128xf32>
    %33 = arith.maximumf %31, %32 : vector<128x128xf32>
    %34 = arith.truncf %33 : vector<128x128xf32> to vector<128x128xbf16>
    %c0_28 = arith.constant 0 : index
    %c0_29 = arith.constant 0 : index
    %c0_30 = arith.constant 0 : index
    %35 = vector.load %arg10[%c0_28, %c0_29, %c0_30] : memref<1x128x128xbf16, #tpu.memory_space<vmem>>, vector<1x128x128xbf16>
    %36 = vector.shape_cast %35 : vector<1x128x128xbf16> to vector<128x128xbf16>
    %cst_31 = arith.constant dense<0.000000e+00> : vector<128x128xf32>
    %37 = tpu.matmul %34, %36, %cst_31 {dimension_numbers = #tpu.dot_dimension_numbers<[1], [0], [0], [1], [0, 0, 1, 1], [], []>} : vector<128x128xbf16>, vector<128x128xbf16>, vector<128x128xf32> -> vector<128x128xf32>
    %c0_32 = arith.constant 0 : index
    %c0_33 = arith.constant 0 : index
    %c0_34 = arith.constant 0 : index
    %38 = vector.load %arg11[%c0_32, %c0_33, %c0_34] : memref<1x1x128xf32, #tpu.memory_space<vmem>>, vector<1x1x128xf32>
    %39 = vector.shape_cast %38 : vector<1x1x128xf32> to vector<1x128xf32>
    %40 = vector.broadcast %39 : vector<1x128xf32> to vector<128x128xf32>
    %41 = arith.addf %37, %40 : vector<128x128xf32>
    %c1_i32 = arith.constant 1 : i32
    %42 = arith.cmpi ne, %arg0, %c1_i32 : i32
    %43 = arith.extui %42 : i1 to i32
    %c0_i32_35 = arith.constant 0 : i32
    %44 = arith.cmpi ne, %43, %c0_i32_35 : i32
    scf.if %44 {
      %cst_38 = arith.constant 0.000000e+00 : f32
      %48 = vector.broadcast %cst_38 : f32 to vector<128x128xf32>
      %49 = arith.maximumf %41, %48 : vector<128x128xf32>
      %50 = arith.addf %49, %3 : vector<128x128xf32>
      %c0_39 = arith.constant 0 : index
      %c0_40 = arith.constant 0 : index
      %51 = vector.load %arg20[%c0_39, %c0_40] : memref<128x128xf32, #tpu.memory_space<vmem>>, vector<128x128xf32>
      tpu.vector_store %arg20[%c0_39, %c0_40], %50 {strides = array<i32>} : memref<128x128xf32, #tpu.memory_space<vmem>>, vector<128x128xf32>,
      %52 = arith.truncf %50 : vector<128x128xf32> to vector<128x128xbf16>
      %c0_41 = arith.constant 0 : index
      %c0_42 = arith.constant 0 : index
      %53 = vector.load %arg21[%c0_41, %c0_42] : memref<128x128xbf16, #tpu.memory_space<vmem>>, vector<128x128xbf16>
      tpu.vector_store %arg21[%c0_41, %c0_42], %52 {strides = array<i32>} : memref<128x128xbf16, #tpu.memory_space<vmem>>, vector<128x128xbf16>,
    } else {
    }
    %c1_i32_36 = arith.constant 1 : i32
    %45 = arith.cmpi eq, %arg0, %c1_i32_36 : i32
    %46 = arith.extui %45 : i1 to i32
    %c0_i32_37 = arith.constant 0 : i32
    %47 = arith.cmpi ne, %46, %c0_i32_37 : i32
    scf.if %47 {
      %48 = arith.addf %41, %3 : vector<128x128xf32>
      %c0_38 = arith.constant 0 : index
      %c0_39 = arith.constant 0 : index
      %49 = vector.load %arg13[%c0_38, %c0_39] : memref<2x128xbf16, #tpu.memory_space<vmem>>, vector<2x128xbf16>
      %50 = arith.truncf %48 : vector<128x128xf32> to vector<128x128xbf16>
      %cst_40 = arith.constant dense<0.000000e+00> : vector<2x128xf32>
      %51 = tpu.matmul %49, %50, %cst_40 {dimension_numbers = #tpu.dot_dimension_numbers<[1], [0], [0], [1], [0, 0, 1, 1], [], []>} : vector<2x128xbf16>, vector<128x128xbf16>, vector<2x128xf32> -> vector<2x128xf32>
      %c0_41 = arith.constant 0 : index
      %c0_42 = arith.constant 0 : index
      %52 = vector.load %arg14[%c0_41, %c0_42] : memref<2x1xf32, #tpu.memory_space<vmem>>, vector<2x1xf32>
      %53 = vector.broadcast %52 : vector<2x1xf32> to vector<2x128xf32>
      %54 = arith.mulf %51, %53 : vector<2x128xf32>
      %55 = arith.truncf %54 : vector<2x128xf32> to vector<2x128xbf16>
      %c0_43 = arith.constant 0 : index
      %c0_44 = arith.constant 0 : index
      %56 = vector.load %arg15[%c0_43, %c0_44] : memref<128x128xbf16, #tpu.memory_space<vmem>>, vector<128x128xbf16>
      %cst_45 = arith.constant dense<0.000000e+00> : vector<2x128xf32>
      %57 = tpu.matmul %55, %56, %cst_45 {dimension_numbers = #tpu.dot_dimension_numbers<[1], [0], [0], [1], [0, 0, 1, 1], [], []>} : vector<2x128xbf16>, vector<128x128xbf16>, vector<2x128xf32> -> vector<2x128xf32>
      %c0_46 = arith.constant 0 : index
      %c0_47 = arith.constant 0 : index
      %58 = vector.load %arg16[%c0_46, %c0_47] : memref<1x128xf32, #tpu.memory_space<vmem>>, vector<1x128xf32>
      %59 = vector.broadcast %58 : vector<1x128xf32> to vector<2x128xf32>
      %60 = arith.addf %57, %59 : vector<2x128xf32>
      %cst_48 = arith.constant 0.000000e+00 : f32
      %61 = vector.broadcast %cst_48 : f32 to vector<2x128xf32>
      %62 = arith.maximumf %60, %61 : vector<2x128xf32>
      %63 = arith.truncf %62 : vector<2x128xf32> to vector<2x128xbf16>
      %c0_49 = arith.constant 0 : index
      %c0_50 = arith.constant 0 : index
      %64 = vector.load %arg17[%c0_49, %c0_50] : memref<128x128xbf16, #tpu.memory_space<vmem>>, vector<128x128xbf16>
      %cst_51 = arith.constant dense<0.000000e+00> : vector<2x128xf32>
      %65 = tpu.matmul %63, %64, %cst_51 {dimension_numbers = #tpu.dot_dimension_numbers<[1], [0], [0], [1], [0, 0, 1, 1], [], []>} : vector<2x128xbf16>, vector<128x128xbf16>, vector<2x128xf32> -> vector<2x128xf32>
      %c0_52 = arith.constant 0 : index
      %c0_53 = arith.constant 0 : index
      %66 = vector.load %arg18[%c0_52, %c0_53] : memref<1x128xf32, #tpu.memory_space<vmem>>, vector<1x128xf32>
      %67 = vector.broadcast %66 : vector<1x128xf32> to vector<2x128xf32>
      %68 = arith.addf %65, %67 : vector<2x128xf32>
      %c0_54 = arith.constant 0 : index
      %c0_55 = arith.constant 0 : index
      %69 = vector.load %arg19[%c0_54, %c0_55] : memref<2x128xf32, #tpu.memory_space<vmem>>, vector<2x128xf32>
      tpu.vector_store %arg19[%c0_54, %c0_55], %68 {strides = array<i32>} : memref<2x128xf32, #tpu.memory_space<vmem>>, vector<2x128xf32>,
    } else {
    }
    return
  }
  func.func @transform_0(%arg0: i32) -> (i32, i32) {
    %c0_i32 = arith.constant 0 : i32
    %c0_i32_0 = arith.constant 0 : i32
    %c0_i32_1 = arith.constant 0 : i32
    return %c0_i32, %c0_i32_0 : i32, i32
  }
  func.func @transform_1(%arg0: i32) -> (i32, i32) {
    %c0_i32 = arith.constant 0 : i32
    %c0_i32_0 = arith.constant 0 : i32
    %c0_i32_1 = arith.constant 0 : i32
    return %c0_i32, %c0_i32_0 : i32, i32
  }
  func.func @transform_2(%arg0: i32) -> (i32, i32) {
    %c0_i32 = arith.constant 0 : i32
    %c0_i32_0 = arith.constant 0 : i32
    %c0_i32_1 = arith.constant 0 : i32
    return %c0_i32, %c0_i32_0 : i32, i32
  }
  func.func @transform_3(%arg0: i32) -> (i32, i32) {
    %c0_i32 = arith.constant 0 : i32
    %c0_i32_0 = arith.constant 0 : i32
    %c0_i32_1 = arith.constant 0 : i32
    return %c0_i32, %c0_i32_0 : i32, i32
  }
  func.func @transform_4(%arg0: i32) -> (i32, i32) {
    %c0_i32 = arith.constant 0 : i32
    %c0_i32_0 = arith.constant 0 : i32
    %c0_i32_1 = arith.constant 0 : i32
    return %c0_i32, %c0_i32_0 : i32, i32
  }
  func.func @transform_5(%arg0: i32) -> (i32, i32) {
    %c0_i32 = arith.constant 0 : i32
    %c0_i32_0 = arith.constant 0 : i32
    %c0_i32_1 = arith.constant 0 : i32
    return %c0_i32, %c0_i32_0 : i32, i32
  }
  func.func @transform_6(%arg0: i32) -> (i32, i32, i32) {
    %c0_i32 = arith.constant 0 : i32
    %c0_i32_0 = arith.constant 0 : i32
    %c0_i32_1 = arith.constant 0 : i32
    return %arg0, %c0_i32, %c0_i32_0 : i32, i32, i32
  }
  func.func @transform_7(%arg0: i32) -> (i32, i32, i32) {
    %c0_i32 = arith.constant 0 : i32
    %c0_i32_0 = arith.constant 0 : i32
    %c0_i32_1 = arith.constant 0 : i32
    return %arg0, %c0_i32, %c0_i32_0 : i32, i32, i32
  }
  func.func @transform_8(%arg0: i32) -> (i32, i32, i32) {
    %c0_i32 = arith.constant 0 : i32
    %c0_i32_0 = arith.constant 0 : i32
    %c0_i32_1 = arith.constant 0 : i32
    return %arg0, %c0_i32, %c0_i32_0 : i32, i32, i32
  }
  func.func @transform_9(%arg0: i32) -> (i32, i32, i32) {
    %c0_i32 = arith.constant 0 : i32
    %c0_i32_0 = arith.constant 0 : i32
    %c0_i32_1 = arith.constant 0 : i32
    return %arg0, %c0_i32, %c0_i32_0 : i32, i32, i32
  }
  func.func @transform_10(%arg0: i32) -> (i32, i32, i32) {
    %c0_i32 = arith.constant 0 : i32
    %c0_i32_0 = arith.constant 0 : i32
    %c0_i32_1 = arith.constant 0 : i32
    return %arg0, %c0_i32, %c0_i32_0 : i32, i32, i32
  }
  func.func @transform_11(%arg0: i32) -> (i32, i32, i32) {
    %c0_i32 = arith.constant 0 : i32
    %c0_i32_0 = arith.constant 0 : i32
    %c0_i32_1 = arith.constant 0 : i32
    return %arg0, %c0_i32, %c0_i32_0 : i32, i32, i32
  }
  func.func @transform_12(%arg0: i32) -> (i32, i32) {
    %c0_i32 = arith.constant 0 : i32
    %c0_i32_0 = arith.constant 0 : i32
    %c0_i32_1 = arith.constant 0 : i32
    return %c0_i32, %c0_i32_0 : i32, i32
  }
  func.func @transform_13(%arg0: i32) -> (i32, i32) {
    %c0_i32 = arith.constant 0 : i32
    %c0_i32_0 = arith.constant 0 : i32
    %c0_i32_1 = arith.constant 0 : i32
    return %c0_i32, %c0_i32_0 : i32, i32
  }
  func.func @transform_14(%arg0: i32) -> (i32, i32) {
    %c0_i32 = arith.constant 0 : i32
    %c0_i32_0 = arith.constant 0 : i32
    %c0_i32_1 = arith.constant 0 : i32
    return %c0_i32, %c0_i32_0 : i32, i32
  }
  func.func @transform_15(%arg0: i32) -> (i32, i32) {
    %c0_i32 = arith.constant 0 : i32
    %c0_i32_0 = arith.constant 0 : i32
    %c0_i32_1 = arith.constant 0 : i32
    return %c0_i32, %c0_i32_0 : i32, i32
  }
  func.func @transform_16(%arg0: i32) -> (i32, i32) {
    %c0_i32 = arith.constant 0 : i32
    %c0_i32_0 = arith.constant 0 : i32
    %c0_i32_1 = arith.constant 0 : i32
    return %c0_i32, %c0_i32_0 : i32, i32
  }
  func.func @transform_17(%arg0: i32) -> (i32, i32) {
    %c0_i32 = arith.constant 0 : i32
    %c0_i32_0 = arith.constant 0 : i32
    %c0_i32_1 = arith.constant 0 : i32
    return %c0_i32, %c0_i32_0 : i32, i32
  }
  func.func @transform_18(%arg0: i32) -> (i32, i32) {
    %c0_i32 = arith.constant 0 : i32
    %c0_i32_0 = arith.constant 0 : i32
    %c0_i32_1 = arith.constant 0 : i32
    return %c0_i32, %c0_i32_0 : i32, i32
  }
}

</mosaic_0001>

<llo_original>
// kernel: tpu_custom_call.1
$region0: #{tpu_custom_call.1}
  #allocation0 [shape = 'u32[]', space=smem, size = 0x4, offset = 0x4, fixed_abs, tag = 'smem constant byte address 0x4 - core index']
  #allocation1 [shape = 'u32[72,128]{1,0:T(1,128)}', space=vmem, size = 0x9000, scoped, tag = 'internal scratch']
  #allocation2 [shape = 'f32[128,128]{1,0:T(8,128)}', space=vmem, size = 0x10000, scoped, tag = 'scratch operand']
  #allocation3 [shape = 'bf16[128,128]{1,0:T(8,128)(2,1)}', space=vmem, size = 0x8000, scoped, tag = 'scratch operand']
  #allocation4 [shape = 'bf16[128,128]{1,0:T(8,128)(2,1)}', space=vmem, size = 0x8000, scoped, tag = 'scratch operand']
  #allocation5 [shape = 'bf16[128,128]{1,0:T(8,128)(2,1)}', space=vmem, size = 0x8000, scoped, tag = 'scratch operand']
  #allocation6 [shape = 'bf16[128,128]{1,0:T(8,128)(2,1)}', space=vmem, size = 0x8000, scoped, tag = 'scratch operand']
  %s0 = inlined_call_operand.vmem [shape: f32[128,128], index: 0, kind: input, shape index: {}]
  %s1 = inlined_call_operand.vmem [shape: f32[128,128], index: 1, kind: input, shape index: {}]
  %s2 = inlined_call_operand.vmem [shape: f32[1,128], index: 2, kind: input, shape index: {}]
  %s3 = inlined_call_operand.vmem [shape: s32[128,1], index: 3, kind: input, shape index: {}]
  %s4 = inlined_call_operand.vmem [shape: s32[1,128], index: 4, kind: input, shape index: {}]
  %s5 = inlined_call_operand.vmem [shape: s32[128,1], index: 5, kind: input, shape index: {}]
  %s6 = inlined_call_operand.hbm [shape: bf16[2,128,128], index: 6, kind: input, shape index: {}]
  %s7 = inlined_call_operand.hbm [shape: bf16[2,128,128], index: 7, kind: input, shape index: {}]
  %s8 = inlined_call_operand.vmem [shape: f32[2,1,128], index: 8, kind: input, shape index: {}]
  %s9 = inlined_call_operand.hbm [shape: bf16[2,128,128], index: 9, kind: input, shape index: {}]
  %s10 = inlined_call_operand.vmem [shape: f32[2,1,128], index: 10, kind: input, shape index: {}]
  %s11 = inlined_call_operand.vmem [shape: f32[2,1,1], index: 11, kind: input, shape index: {}]
  %s12 = inlined_call_operand.vmem [shape: bf16[2,128], index: 12, kind: input, shape index: {}]
  %s13 = inlined_call_operand.vmem [shape: f32[2,1], index: 13, kind: input, shape index: {}]
  %s14 = inlined_call_operand.hbm [shape: bf16[128,128], index: 14, kind: input, shape index: {}]
  %s15 = inlined_call_operand.vmem [shape: f32[1,128], index: 15, kind: input, shape index: {}]
  %s16 = inlined_call_operand.hbm [shape: bf16[128,128], index: 16, kind: input, shape index: {}]
  %s17 = inlined_call_operand.vmem [shape: f32[1,128], index: 17, kind: input, shape index: {}]
  %s18 = inlined_call_operand.hbm [shape: f32[2,128], index: 18, kind: output, shape index: {}]
  %s19 = sld [smem:[#allocation0]]
  $region137: #{tpu_custom_call.1} parent=0
    _
  %s21 = ssub.s32 1, %s19
  %s22 = scalar_select 0, %s21, %s19
  $region1: #{tpu_custom_call.1} parent=0
    #allocation7 [shape = 'u8[65536]{0}', space=vmem, size = 0x10000, scoped, tag = 'input window, operand 6']
    #allocation8 [shape = 's32[2]{0}', space=sflag, size = 0x8, scoped, tag = 'scoped memory for tpu_custom_call.1']
    #allocation9 [shape = 's32[2]{0}', space=sflag, size = 0x8, scoped, tag = 'scoped memory for tpu_custom_call.1']
    #allocation10 [shape = 'u8[65536]{0}', space=vmem, size = 0x10000, scoped, tag = 'input window, operand 7']
    #allocation11 [shape = 's32[2]{0}', space=sflag, size = 0x8, scoped, tag = 'scoped memory for tpu_custom_call.1']
    #allocation12 [shape = 'u8[65536]{0}', space=vmem, size = 0x10000, scoped, tag = 'input window, operand 9']
    #allocation13 [shape = 'u8[32768]{0}', space=vmem, size = 0x8000, scoped, tag = 'input window, operand 14, single buffered']
    #allocation14 [shape = 's32[1]{0}', space=sflag, size = 0x4, scoped, tag = 'scoped memory for tpu_custom_call.1']
    #allocation15 [shape = 'u8[32768]{0}', space=vmem, size = 0x8000, scoped, tag = 'input window, operand 16, single buffered']
    #allocation16 [shape = 'u8[1024]{0}', space=vmem, size = 0x400, scoped, tag = 'output window, operand 0, single buffered']
    %23 = vsyncpa [#allocation8], 0
    %s24 = scalar_lea.sflag [#allocation8], 1
    %25 = vsyncpa %s24, 0
    %26 = vsyncpa [#allocation11], 0
    %s27 = scalar_lea.sflag [#allocation11], 1
    %28 = vsyncpa %s27, 0
    %29 = vsyncpa [#allocation14], 0
    %30 = vsyncpa [#allocation9], 0
    loop: start=0, step=1, limit=4
    $region2: #{tpu_custom_call.1} parent=1 // loop_pre_header
      _
    $region3: #{tpu_custom_call.1} parent=1 // loop_header
      %s32 = sphi 0, %s36
      %p33 = scmp.ge.s32.totalorder %s32, 4
      %s40 = sphi 0, %s40
      %s42 = sphi 0, %s40
      %s43 = sphi 0, %s42
      %s57 = sphi 0, %s43
      %s61 = sphi 0, %s61
      %s63 = sphi 0, %s61
      %s64 = sphi 0, %s63
      %s78 = sphi 0, %s64
      %s82 = sphi 0, %s82
      %s84 = sphi 0, %s82
      %s85 = sphi 0, %s84
      %s99 = sphi 0, %s85
      %s103 = sphi 0, %s103
      %s105 = sphi 0, %s103
      %s106 = sphi 0, %s105
      %s120 = sphi 0, %s106
      %s124 = sphi 0, %s124
      %s126 = sphi 0, %s124
      %s127 = sphi 0, %s126
      %s141 = sphi 0, %s127
      %s145 = sphi 0, %s145
      %s147 = sphi 0, %s145
      %s148 = sphi 0, %s147
      %s162 = sphi 0, %s148
      %s168 = sphi 0, %s170
      %s171 = sphi 0, %s168
      %s172 = sphi 0, %s171
      %s188 = sphi 0, %s172
      %s194 = sphi 0, %s196
      %s197 = sphi 0, %s194
      %s198 = sphi 0, %s197
      %s214 = sphi 0, %s198
      %s220 = sphi 0, %s222
      %s223 = sphi 0, %s220
      %s224 = sphi 0, %s223
      %s240 = sphi 0, %s224
      %s246 = sphi 0, %s248
      %s249 = sphi 0, %s246
      %s250 = sphi 0, %s249
      %s266 = sphi 0, %s250
      %s272 = sphi 0, %s274
      %s275 = sphi 0, %s272
      %s276 = sphi 0, %s275
      %s292 = sphi 0, %s276
      %s298 = sphi 0, %s300
      %s301 = sphi 0, %s298
      %s302 = sphi 0, %s301
      %s318 = sphi 0, %s302
      %s322 = sphi 0, %s322
      %s324 = sphi 0, %s322
      %s325 = sphi 0, %s324
      %s339 = sphi 0, %s325
      %s343 = sphi 0, %s343
      %s345 = sphi 0, %s343
      %s346 = sphi 0, %s345
      %s360 = sphi 0, %s346
      %s364 = sphi 0, %s364
      %s366 = sphi 0, %s364
      %s367 = sphi 0, %s366
      %s381 = sphi 0, %s367
      %s385 = sphi 0, %s385
      %s387 = sphi 0, %s385
      %s388 = sphi 0, %s387
      %s402 = sphi 0, %s388
      %s406 = sphi 0, %s406
      %s408 = sphi 0, %s406
      %s409 = sphi 0, %s408
      %s423 = sphi 0, %s409
      %s427 = sphi 0, %s427
      %s429 = sphi 0, %s427
      %s430 = sphi 0, %s429
      %s444 = sphi 0, %s430
      %s448 = sphi 0, %s448
      %s450 = sphi 0, %s448
      %s451 = sphi 0, %s450
      %s465 = sphi 0, %s451
    $region4: #{tpu_custom_call.1} parent=1 // loop_header_branch
      %35 = sbr.rel (%p33) target = $region8
    $region5: #{tpu_custom_call.1} parent=1 // loop_body
      %s37 = ssub.s32 %s32, 1
      %s38 = ssub.s32 %s32, 2
      %s39 = sadd.s32 %s32, 1
      %s41 = sadd.s32 %s40, 1
      %p44 = scmp.eq.s32.totalorder %s32, 1
      %p45 = scmp.ne.s32.totalorder %s40, %s42
      %p46 = scmp.eq.s32.totalorder %s32, 0
      %p47 = por %p45, %p46
      %p48 = scmp.ne.s32.totalorder %s40, %s42
      %p49 = scmp.eq.s32.totalorder %s37, 1
      %p50 = por %p48, %p49
      %p51 = scmp.ne.s32.totalorder %s42, %s43
      %p52 = scmp.eq.s32.totalorder %s37, 0
      %p53 = por %p51, %p52
      %p54 = scmp.ne.s32.totalorder %s42, %s43
      %p55 = scmp.eq.s32.totalorder %s38, 1
      %p56 = por %p54, %p55
      %p58 = scmp.ne.s32.totalorder %s43, %s57
      %p59 = scmp.eq.s32.totalorder %s38, 0
      %p60 = por %p58, %p59
      %s62 = sadd.s32 %s61, 1
      %p65 = scmp.eq.s32.totalorder %s32, 1
      %p66 = scmp.ne.s32.totalorder %s61, %s63
      %p67 = scmp.eq.s32.totalorder %s32, 0
      %p68 = por %p66, %p67
      %p69 = scmp.ne.s32.totalorder %s61, %s63
      %p70 = scmp.eq.s32.totalorder %s37, 1
      %p71 = por %p69, %p70
      %p72 = scmp.ne.s32.totalorder %s63, %s64
      %p73 = scmp.eq.s32.totalorder %s37, 0
      %p74 = por %p72, %p73
      %p75 = scmp.ne.s32.totalorder %s63, %s64
      %p76 = scmp.eq.s32.totalorder %s38, 1
      %p77 = por %p75, %p76
      %p79 = scmp.ne.s32.totalorder %s64, %s78
      %p80 = scmp.eq.s32.totalorder %s38, 0
      %p81 = por %p79, %p80
      %s83 = sadd.s32 %s82, 1
      %p86 = scmp.eq.s32.totalorder %s32, 1
      %p87 = scmp.ne.s32.totalorder %s82, %s84
      %p88 = scmp.eq.s32.totalorder %s32, 0
      %p89 = por %p87, %p88
      %p90 = scmp.ne.s32.totalorder %s82, %s84
      %p91 = scmp.eq.s32.totalorder %s37, 1
      %p92 = por %p90, %p91
      %p93 = scmp.ne.s32.totalorder %s84, %s85
      %p94 = scmp.eq.s32.totalorder %s37, 0
      %p95 = por %p93, %p94
      %p96 = scmp.ne.s32.totalorder %s84, %s85
      %p97 = scmp.eq.s32.totalorder %s38, 1
      %p98 = por %p96, %p97
      %p100 = scmp.ne.s32.totalorder %s85, %s99
      %p101 = scmp.eq.s32.totalorder %s38, 0
      %p102 = por %p100, %p101
      %s104 = sadd.s32 %s103, 1
      %p107 = scmp.eq.s32.totalorder %s32, 1
      %p108 = scmp.ne.s32.totalorder %s103, %s105
      %p109 = scmp.eq.s32.totalorder %s32, 0
      %p110 = por %p108, %p109
      %p111 = scmp.ne.s32.totalorder %s103, %s105
      %p112 = scmp.eq.s32.totalorder %s37, 1
      %p113 = por %p111, %p112
      %p114 = scmp.ne.s32.totalorder %s105, %s106
      %p115 = scmp.eq.s32.totalorder %s37, 0
      %p116 = por %p114, %p115
      %p117 = scmp.ne.s32.totalorder %s105, %s106
      %p118 = scmp.eq.s32.totalorder %s38, 1
      %p119 = por %p117, %p118
      %p121 = scmp.ne.s32.totalorder %s106, %s120
      %p122 = scmp.eq.s32.totalorder %s38, 0
      %p123 = por %p121, %p122
      %s125 = sadd.s32 %s124, 1
      %p128 = scmp.eq.s32.totalorder %s32, 1
      %p129 = scmp.ne.s32.totalorder %s124, %s126
      %p130 = scmp.eq.s32.totalorder %s32, 0
      %p131 = por %p129, %p130
      %p132 = scmp.ne.s32.totalorder %s124, %s126
      %p133 = scmp.eq.s32.totalorder %s37, 1
      %p134 = por %p132, %p133
      %p135 = scmp.ne.s32.totalorder %s126, %s127
      %p136 = scmp.eq.s32.totalorder %s37, 0
      %p137 = por %p135, %p136
      %p138 = scmp.ne.s32.totalorder %s126, %s127
      %p139 = scmp.eq.s32.totalorder %s38, 1
      %p140 = por %p138, %p139
      %p142 = scmp.ne.s32.totalorder %s127, %s141
      %p143 = scmp.eq.s32.totalorder %s38, 0
      %p144 = por %p142, %p143
      %s146 = sadd.s32 %s145, 1
      %p149 = scmp.eq.s32.totalorder %s32, 1
      %p150 = scmp.ne.s32.totalorder %s145, %s147
      %p151 = scmp.eq.s32.totalorder %s32, 0
      %p152 = por %p150, %p151
      %p153 = scmp.ne.s32.totalorder %s145, %s147
      %p154 = scmp.eq.s32.totalorder %s37, 1
      %p155 = por %p153, %p154
      %p156 = scmp.ne.s32.totalorder %s147, %s148
      %p157 = scmp.eq.s32.totalorder %s37, 0
      %p158 = por %p156, %p157
      %p159 = scmp.ne.s32.totalorder %s147, %s148
      %p160 = scmp.eq.s32.totalorder %s38, 1
      %p161 = por %p159, %p160
      %p163 = scmp.ne.s32.totalorder %s148, %s162
      %p164 = scmp.eq.s32.totalorder %s38, 0
      %p165 = por %p163, %p164
      %s166 = ssub.s32 %s32, %s39
      %p167 = scmp.eq.s32.totalorder %s166, 0
      %s169 = sadd.s32 %s168, 1
      %s170 = scalar_select %p167, %s168, %s169
      %p173 = pneg %p167
      %p174 = scmp.eq.s32.totalorder %s32, 1
      %p175 = por %p173, %p174
      %p176 = scmp.ne.s32.totalorder %s168, %s171
      %p177 = scmp.eq.s32.totalorder %s32, 0
      %p178 = por %p176, %p177
      %p179 = scmp.ne.s32.totalorder %s168, %s171
      %p180 = scmp.eq.s32.totalorder %s37, 1
      %p181 = por %p179, %p180
      %p182 = scmp.ne.s32.totalorder %s171, %s172
      %p183 = scmp.eq.s32.totalorder %s37, 0
      %p184 = por %p182, %p183
      %p185 = scmp.ne.s32.totalorder %s171, %s172
      %p186 = scmp.eq.s32.totalorder %s38, 1
      %p187 = por %p185, %p186
      %p189 = scmp.ne.s32.totalorder %s172, %s188
      %p190 = scmp.eq.s32.totalorder %s38, 0
      %p191 = por %p189, %p190
      %s192 = ssub.s32 %s32, %s39
      %p193 = scmp.eq.s32.totalorder %s192, 0
      %s195 = sadd.s32 %s194, 1
      %s196 = scalar_select %p193, %s194, %s195
      %p199 = pneg %p193
      %p200 = scmp.eq.s32.totalorder %s32, 1
      %p201 = por %p199, %p200
      %p202 = scmp.ne.s32.totalorder %s194, %s197
      %p203 = scmp.eq.s32.totalorder %s32, 0
      %p204 = por %p202, %p203
      %p205 = scmp.ne.s32.totalorder %s194, %s197
      %p206 = scmp.eq.s32.totalorder %s37, 1
      %p207 = por %p205, %p206
      %p208 = scmp.ne.s32.totalorder %s197, %s198
      %p209 = scmp.eq.s32.totalorder %s37, 0
      %p210 = por %p208, %p209
      %p211 = scmp.ne.s32.totalorder %s197, %s198
      %p212 = scmp.eq.s32.totalorder %s38, 1
      %p213 = por %p211, %p212
      %p215 = scmp.ne.s32.totalorder %s198, %s214
      %p216 = scmp.eq.s32.totalorder %s38, 0
      %p217 = por %p215, %p216
      %s218 = ssub.s32 %s32, %s39
      %p219 = scmp.eq.s32.totalorder %s218, 0
      %s221 = sadd.s32 %s220, 1
      %s222 = scalar_select %p219, %s220, %s221
      %p225 = pneg %p219
      %p226 = scmp.eq.s32.totalorder %s32, 1
      %p227 = por %p225, %p226
      %p228 = scmp.ne.s32.totalorder %s220, %s223
      %p229 = scmp.eq.s32.totalorder %s32, 0
      %p230 = por %p228, %p229
      %p231 = scmp.ne.s32.totalorder %s220, %s223
      %p232 = scmp.eq.s32.totalorder %s37, 1
      %p233 = por %p231, %p232
      %p234 = scmp.ne.s32.totalorder %s223, %s224
      %p235 = scmp.eq.s32.totalorder %s37, 0
      %p236 = por %p234, %p235
      %p237 = scmp.ne.s32.totalorder %s223, %s224
      %p238 = scmp.eq.s32.totalorder %s38, 1
      %p239 = por %p237, %p238
      %p241 = scmp.ne.s32.totalorder %s224, %s240
      %p242 = scmp.eq.s32.totalorder %s38, 0
      %p243 = por %p241, %p242
      %s244 = ssub.s32 %s32, %s39
      %p245 = scmp.eq.s32.totalorder %s244, 0
      %s247 = sadd.s32 %s246, 1
      %s248 = scalar_select %p245, %s246, %s247
      %p251 = pneg %p245
      %p252 = scmp.eq.s32.totalorder %s32, 1
      %p253 = por %p251, %p252
      %p254 = scmp.ne.s32.totalorder %s246, %s249
      %p255 = scmp.eq.s32.totalorder %s32, 0
      %p256 = por %p254, %p255
      %p257 = scmp.ne.s32.totalorder %s246, %s249
      %p258 = scmp.eq.s32.totalorder %s37, 1
      %p259 = por %p257, %p258
      %p260 = scmp.ne.s32.totalorder %s249, %s250
      %p261 = scmp.eq.s32.totalorder %s37, 0
      %p262 = por %p260, %p261
      %p263 = scmp.ne.s32.totalorder %s249, %s250
      %p264 = scmp.eq.s32.totalorder %s38, 1
      %p265 = por %p263, %p264
      %p267 = scmp.ne.s32.totalorder %s250, %s266
      %p268 = scmp.eq.s32.totalorder %s38, 0
      %p269 = por %p267, %p268
      %s270 = ssub.s32 %s32, %s39
      %p271 = scmp.eq.s32.totalorder %s270, 0
      %s273 = sadd.s32 %s272, 1
      %s274 = scalar_select %p271, %s272, %s273
      %p277 = pneg %p271
      %p278 = scmp.eq.s32.totalorder %s32, 1
      %p279 = por %p277, %p278
      %p280 = scmp.ne.s32.totalorder %s272, %s275
      %p281 = scmp.eq.s32.totalorder %s32, 0
      %p282 = por %p280, %p281
      %p283 = scmp.ne.s32.totalorder %s272, %s275
      %p284 = scmp.eq.s32.totalorder %s37, 1
      %p285 = por %p283, %p284
      %p286 = scmp.ne.s32.totalorder %s275, %s276
      %p287 = scmp.eq.s32.totalorder %s37, 0
      %p288 = por %p286, %p287
      %p289 = scmp.ne.s32.totalorder %s275, %s276
      %p290 = scmp.eq.s32.totalorder %s38, 1
      %p291 = por %p289, %p290
      %p293 = scmp.ne.s32.totalorder %s276, %s292
      %p294 = scmp.eq.s32.totalorder %s38, 0
      %p295 = por %p293, %p294
      %s296 = ssub.s32 %s32, %s39
      %p297 = scmp.eq.s32.totalorder %s296, 0
      %s299 = sadd.s32 %s298, 1
      %s300 = scalar_select %p297, %s298, %s299
      %p303 = pneg %p297
      %p304 = scmp.eq.s32.totalorder %s32, 1
      %p305 = por %p303, %p304
      %p306 = scmp.ne.s32.totalorder %s298, %s301
      %p307 = scmp.eq.s32.totalorder %s32, 0
      %p308 = por %p306, %p307
      %p309 = scmp.ne.s32.totalorder %s298, %s301
      %p310 = scmp.eq.s32.totalorder %s37, 1
      %p311 = por %p309, %p310
      %p312 = scmp.ne.s32.totalorder %s301, %s302
      %p313 = scmp.eq.s32.totalorder %s37, 0
      %p314 = por %p312, %p313
      %p315 = scmp.ne.s32.totalorder %s301, %s302
      %p316 = scmp.eq.s32.totalorder %s38, 1
      %p317 = por %p315, %p316
      %p319 = scmp.ne.s32.totalorder %s302, %s318
      %p320 = scmp.eq.s32.totalorder %s38, 0
      %p321 = por %p319, %p320
      %s323 = sadd.s32 %s322, 1
      %p326 = scmp.eq.s32.totalorder %s32, 1
      %p327 = scmp.ne.s32.totalorder %s322, %s324
      %p328 = scmp.eq.s32.totalorder %s32, 0
      %p329 = por %p327, %p328
      %p330 = scmp.ne.s32.totalorder %s322, %s324
      %p331 = scmp.eq.s32.totalorder %s37, 1
      %p332 = por %p330, %p331
      %p333 = scmp.ne.s32.totalorder %s324, %s325
      %p334 = scmp.eq.s32.totalorder %s37, 0
      %p335 = por %p333, %p334
      %p336 = scmp.ne.s32.totalorder %s324, %s325
      %p337 = scmp.eq.s32.totalorder %s38, 1
      %p338 = por %p336, %p337
      %p340 = scmp.ne.s32.totalorder %s325, %s339
      %p341 = scmp.eq.s32.totalorder %s38, 0
      %p342 = por %p340, %p341
      %s344 = sadd.s32 %s343, 1
      %p347 = scmp.eq.s32.totalorder %s32, 1
      %p348 = scmp.ne.s32.totalorder %s343, %s345
      %p349 = scmp.eq.s32.totalorder %s32, 0
      %p350 = por %p348, %p349
      %p351 = scmp.ne.s32.totalorder %s343, %s345
      %p352 = scmp.eq.s32.totalorder %s37, 1
      %p353 = por %p351, %p352
      %p354 = scmp.ne.s32.totalorder %s345, %s346
      %p355 = scmp.eq.s32.totalorder %s37, 0
      %p356 = por %p354, %p355
      %p357 = scmp.ne.s32.totalorder %s345, %s346
      %p358 = scmp.eq.s32.totalorder %s38, 1
      %p359 = por %p357, %p358
      %p361 = scmp.ne.s32.totalorder %s346, %s360
      %p362 = scmp.eq.s32.totalorder %s38, 0
      %p363 = por %p361, %p362
      %s365 = sadd.s32 %s364, 1
      %p368 = scmp.eq.s32.totalorder %s32, 1
      %p369 = scmp.ne.s32.totalorder %s364, %s366
      %p370 = scmp.eq.s32.totalorder %s32, 0
      %p371 = por %p369, %p370
      %p372 = scmp.ne.s32.totalorder %s364, %s366
      %p373 = scmp.eq.s32.totalorder %s37, 1
      %p374 = por %p372, %p373
      %p375 = scmp.ne.s32.totalorder %s366, %s367
      %p376 = scmp.eq.s32.totalorder %s37, 0
      %p377 = por %p375, %p376
      %p378 = scmp.ne.s32.totalorder %s366, %s367
      %p379 = scmp.eq.s32.totalorder %s38, 1
      %p380 = por %p378, %p379
      %p382 = scmp.ne.s32.totalorder %s367, %s381
      %p383 = scmp.eq.s32.totalorder %s38, 0
      %p384 = por %p382, %p383
      %s386 = sadd.s32 %s385, 1
      %p389 = scmp.eq.s32.totalorder %s32, 1
      %p390 = scmp.ne.s32.totalorder %s385, %s387
      %p391 = scmp.eq.s32.totalorder %s32, 0
      %p392 = por %p390, %p391
      %p393 = scmp.ne.s32.totalorder %s385, %s387
      %p394 = scmp.eq.s32.totalorder %s37, 1
      %p395 = por %p393, %p394
      %p396 = scmp.ne.s32.totalorder %s387, %s388
      %p397 = scmp.eq.s32.totalorder %s37, 0
      %p398 = por %p396, %p397
      %p399 = scmp.ne.s32.totalorder %s387, %s388
      %p400 = scmp.eq.s32.totalorder %s38, 1
      %p401 = por %p399, %p400
      %p403 = scmp.ne.s32.totalorder %s388, %s402
      %p404 = scmp.eq.s32.totalorder %s38, 0
      %p405 = por %p403, %p404
      %s407 = sadd.s32 %s406, 1
      %p410 = scmp.eq.s32.totalorder %s32, 1
      %p411 = scmp.ne.s32.totalorder %s406, %s408
      %p412 = scmp.eq.s32.totalorder %s32, 0
      %p413 = por %p411, %p412
      %p414 = scmp.ne.s32.totalorder %s406, %s408
      %p415 = scmp.eq.s32.totalorder %s37, 1
      %p416 = por %p414, %p415
      %p417 = scmp.ne.s32.totalorder %s408, %s409
      %p418 = scmp.eq.s32.totalorder %s37, 0
      %p419 = por %p417, %p418
      %p420 = scmp.ne.s32.totalorder %s408, %s409
      %p421 = scmp.eq.s32.totalorder %s38, 1
      %p422 = por %p420, %p421
      %p424 = scmp.ne.s32.totalorder %s409, %s423
      %p425 = scmp.eq.s32.totalorder %s38, 0
      %p426 = por %p424, %p425
      %s428 = sadd.s32 %s427, 1
      %p431 = scmp.eq.s32.totalorder %s32, 1
      %p432 = scmp.ne.s32.totalorder %s427, %s429
      %p433 = scmp.eq.s32.totalorder %s32, 0
      %p434 = por %p432, %p433
      %p435 = scmp.ne.s32.totalorder %s427, %s429
      %p436 = scmp.eq.s32.totalorder %s37, 1
      %p437 = por %p435, %p436
      %p438 = scmp.ne.s32.totalorder %s429, %s430
      %p439 = scmp.eq.s32.totalorder %s37, 0
      %p440 = por %p438, %p439
      %p441 = scmp.ne.s32.totalorder %s429, %s430
      %p442 = scmp.eq.s32.totalorder %s38, 1
      %p443 = por %p441, %p442
      %p445 = scmp.ne.s32.totalorder %s430, %s444
      %p446 = scmp.eq.s32.totalorder %s38, 0
      %p447 = por %p445, %p446
      %s449 = sadd.s32 %s448, 1
      %p452 = scmp.eq.s32.totalorder %s32, 1
      %p453 = scmp.ne.s32.totalorder %s448, %s450
      %p454 = scmp.eq.s32.totalorder %s32, 0
      %p455 = por %p453, %p454
      %p456 = scmp.ne.s32.totalorder %s448, %s450
      %p457 = scmp.eq.s32.totalorder %s37, 1
      %p458 = por %p456, %p457
      %p459 = scmp.ne.s32.totalorder %s450, %s451
      %p460 = scmp.eq.s32.totalorder %s37, 0
      %p461 = por %p459, %p460
      %p462 = scmp.ne.s32.totalorder %s450, %s451
      %p463 = scmp.eq.s32.totalorder %s38, 1
      %p464 = por %p462, %p463
      %p466 = scmp.ne.s32.totalorder %s451, %s465
      %p467 = scmp.eq.s32.totalorder %s38, 0
      %p468 = por %p466, %p467
      %p469 = scmp.le.s32.totalorder 1, %s32
      %p470 = scmp.lt.s32.totalorder %s32, 3
      %p471 = pnand %p469, %p470
      %p472 = pneg %p471
      // Predicated region
      $region9: #{tpu_custom_call.1} parent=5 // pred_check
        _
      $region10: #{tpu_custom_call.1} parent=5 // pred_check_branch
        %474 = sbr.rel (%p471) target = $region12
      $region11: #{tpu_custom_call.1} parent=5 // pred_region
        %s475 = ssub.s32 %s32, 1
        // Predicated region
        $region13: #{tpu_custom_call.1} parent=11 // pred_check
          %p476 = pneg %p53
        $region14: #{tpu_custom_call.1} parent=11 // pred_check_branch
          %478 = sbr.rel (%p476) target = $region16
        $region15: #{tpu_custom_call.1} parent=11 // pred_region
          _
        $region16: #{tpu_custom_call.1} parent=11 // pred_fallthru
          _
        // Predicated region
        $region17: #{tpu_custom_call.1} parent=11 // pred_check
          %p479 = pneg %p74
        $region18: #{tpu_custom_call.1} parent=11 // pred_check_branch
          %481 = sbr.rel (%p479) target = $region20
        $region19: #{tpu_custom_call.1} parent=11 // pred_region
          _
        $region20: #{tpu_custom_call.1} parent=11 // pred_fallthru
          _
        // Predicated region
        $region21: #{tpu_custom_call.1} parent=11 // pred_check
          %p482 = pneg %p95
        $region22: #{tpu_custom_call.1} parent=11 // pred_check_branch
          %484 = sbr.rel (%p482) target = $region24
        $region23: #{tpu_custom_call.1} parent=11 // pred_region
          _
        $region24: #{tpu_custom_call.1} parent=11 // pred_fallthru
          _
        // Predicated region
        $region25: #{tpu_custom_call.1} parent=11 // pred_check
          %p485 = pneg %p116
        $region26: #{tpu_custom_call.1} parent=11 // pred_check_branch
          %487 = sbr.rel (%p485) target = $region28
        $region27: #{tpu_custom_call.1} parent=11 // pred_region
          _
        $region28: #{tpu_custom_call.1} parent=11 // pred_fallthru
          _
        // Predicated region
        $region29: #{tpu_custom_call.1} parent=11 // pred_check
          %p488 = pneg %p137
        $region30: #{tpu_custom_call.1} parent=11 // pred_check_branch
          %490 = sbr.rel (%p488) target = $region32
        $region31: #{tpu_custom_call.1} parent=11 // pred_region
          _
        $region32: #{tpu_custom_call.1} parent=11 // pred_fallthru
          _
        // Predicated region
        $region33: #{tpu_custom_call.1} parent=11 // pred_check
          %p491 = pneg %p158
        $region34: #{tpu_custom_call.1} parent=11 // pred_check_branch
          %493 = sbr.rel (%p491) target = $region36
        $region35: #{tpu_custom_call.1} parent=11 // pred_region
          _
        $region36: #{tpu_custom_call.1} parent=11 // pred_fallthru
          _
        // Predicated region
        $region37: #{tpu_custom_call.1} parent=11 // pred_check
          %p494 = pneg %p335
        $region38: #{tpu_custom_call.1} parent=11 // pred_check_branch
          %496 = sbr.rel (%p494) target = $region40
        $region39: #{tpu_custom_call.1} parent=11 // pred_region
          _
        $region40: #{tpu_custom_call.1} parent=11 // pred_fallthru
          _
        // Predicated region
        $region41: #{tpu_custom_call.1} parent=11 // pred_check
          %p497 = pneg %p356
        $region42: #{tpu_custom_call.1} parent=11 // pred_check_branch
          %499 = sbr.rel (%p497) target = $region44
        $region43: #{tpu_custom_call.1} parent=11 // pred_region
          _
        $region44: #{tpu_custom_call.1} parent=11 // pred_fallthru
          _
        // Predicated region
        $region45: #{tpu_custom_call.1} parent=11 // pred_check
          %p500 = pneg %p377
        $region46: #{tpu_custom_call.1} parent=11 // pred_check_branch
          %502 = sbr.rel (%p500) target = $region48
        $region47: #{tpu_custom_call.1} parent=11 // pred_region
          %504 = vsyncadd [#allocation14], 0
          %s505 = sshll.u32 %s14, 4
          %s506 = int_to_ptr.hbm [resolvable:$true] %s505
          %s507 = sshll.u32 [#allocation13], 4
          %s508 = int_to_ptr.vmem [resolvable:$true] %s507
          %513 = dma.hbm_to_vmem [thread:$0]  %s506, 1024, %s508, [#allocation14], 64, 64, 4
        $region48: #{tpu_custom_call.1} parent=11 // pred_fallthru
          _
        // Predicated region
        $region49: #{tpu_custom_call.1} parent=11 // pred_check
          %p514 = pneg %p398
        $region50: #{tpu_custom_call.1} parent=11 // pred_check_branch
          %516 = sbr.rel (%p514) target = $region52
        $region51: #{tpu_custom_call.1} parent=11 // pred_region
          _
        $region52: #{tpu_custom_call.1} parent=11 // pred_fallthru
          _
        // Predicated region
        $region53: #{tpu_custom_call.1} parent=11 // pred_check
          %p517 = pneg %p419
        $region54: #{tpu_custom_call.1} parent=11 // pred_check_branch
          %519 = sbr.rel (%p517) target = $region56
        $region55: #{tpu_custom_call.1} parent=11 // pred_region
          %521 = vsyncadd [#allocation14], 0
          %s522 = sshll.u32 %s16, 4
          %s523 = int_to_ptr.hbm [resolvable:$true] %s522
          %s524 = sshll.u32 [#allocation15], 4
          %s525 = int_to_ptr.vmem [resolvable:$true] %s524
          %530 = dma.hbm_to_vmem [thread:$0]  %s523, 1024, %s525, [#allocation14], 64, 64, 4
        $region56: #{tpu_custom_call.1} parent=11 // pred_fallthru
          _
        // Predicated region
        $region57: #{tpu_custom_call.1} parent=11 // pred_check
          %p531 = pneg %p440
        $region58: #{tpu_custom_call.1} parent=11 // pred_check_branch
          %533 = sbr.rel (%p531) target = $region60
        $region59: #{tpu_custom_call.1} parent=11 // pred_region
          _
        $region60: #{tpu_custom_call.1} parent=11 // pred_fallthru
          _
      $region12: #{tpu_custom_call.1} parent=5 // pred_fallthru
        _
      %p534 = scmp.lt.s32.totalorder %s32, 2
      // Predicated region
      $region61: #{tpu_custom_call.1} parent=5 // pred_check
        %p535 = pneg %p534
      $region62: #{tpu_custom_call.1} parent=5 // pred_check_branch
        %537 = sbr.rel (%p535) target = $region64
      $region63: #{tpu_custom_call.1} parent=5 // pred_region
        // Predicated region
        $region65: #{tpu_custom_call.1} parent=63 // pred_check
          %p538 = pneg %p178
        $region66: #{tpu_custom_call.1} parent=63 // pred_check_branch
          %540 = sbr.rel (%p538) target = $region68
        $region67: #{tpu_custom_call.1} parent=63 // pred_region
          %s541 = sand.u32 %s168, 1
          %s542 = scalar_lea.sflag [#allocation8], %s541
          %s543 = sand.u32 %s168, 1
          %s544 = smul.addr %s543, 64
          %s545 = scalar_lea.vmem [#allocation7], %s544
          %547 = vsyncadd %s542, 0
          %s548 = smul.addr %s32, 16
          %s549 = smul.addr %s548, 4
          %s550 = scalar_lea.hbm %s6, %s549
          %s551 = sshll.u32 %s550, 4
          %s552 = int_to_ptr.hbm [resolvable:$true] %s551
          %s553 = sshll.u32 %s545, 4
          %s554 = int_to_ptr.vmem [resolvable:$true] %s553
          %559 = dma.hbm_to_vmem [thread:$0]  %s552, 1024, %s554, %s542, 64, 64, 4
        $region68: #{tpu_custom_call.1} parent=63 // pred_fallthru
          _
        // Predicated region
        $region69: #{tpu_custom_call.1} parent=63 // pred_check
          %p560 = pneg %p204
        $region70: #{tpu_custom_call.1} parent=63 // pred_check_branch
          %562 = sbr.rel (%p560) target = $region72
        $region71: #{tpu_custom_call.1} parent=63 // pred_region
          %s563 = sand.u32 %s32, 1
          %s564 = scalar_lea.sflag [#allocation11], %s563
          %s565 = sand.u32 %s194, 1
          %s566 = smul.addr %s565, 64
          %s567 = scalar_lea.vmem [#allocation10], %s566
          %569 = vsyncadd %s564, 0
          %s570 = smul.addr %s32, 16
          %s571 = smul.addr %s570, 4
          %s572 = scalar_lea.hbm %s7, %s571
          %s573 = sshll.u32 %s572, 4
          %s574 = int_to_ptr.hbm [resolvable:$true] %s573
          %s575 = sshll.u32 %s567, 4
          %s576 = int_to_ptr.vmem [resolvable:$true] %s575
          %581 = dma.hbm_to_vmem [thread:$0]  %s574, 1024, %s576, %s564, 64, 64, 4
        $region72: #{tpu_custom_call.1} parent=63 // pred_fallthru
          _
        // Predicated region
        $region73: #{tpu_custom_call.1} parent=63 // pred_check
          %p582 = pneg %p230
        $region74: #{tpu_custom_call.1} parent=63 // pred_check_branch
          %584 = sbr.rel (%p582) target = $region76
        $region75: #{tpu_custom_call.1} parent=63 // pred_region
          %p585 = scmp.lt.s32.totalorder %s32, 1
          %s586 = scalar_select %p585, %s32, 1
          %s587 = scalar_lea.vmem %s8, %s586
        $region76: #{tpu_custom_call.1} parent=63 // pred_fallthru
          _
        // Predicated region
        $region77: #{tpu_custom_call.1} parent=63 // pred_check
          %p588 = pneg %p256
        $region78: #{tpu_custom_call.1} parent=63 // pred_check_branch
          %590 = sbr.rel (%p588) target = $region80
        $region79: #{tpu_custom_call.1} parent=63 // pred_region
          %s591 = sand.u32 %s32, 1
          %s592 = scalar_lea.sflag [#allocation11], %s591
          %s593 = sand.u32 %s246, 1
          %s594 = smul.addr %s593, 64
          %s595 = scalar_lea.vmem [#allocation12], %s594
          %597 = vsyncadd %s592, 0
          %s598 = smul.addr %s32, 16
          %s599 = smul.addr %s598, 4
          %s600 = scalar_lea.hbm %s9, %s599
          %s601 = sshll.u32 %s600, 4
          %s602 = int_to_ptr.hbm [resolvable:$true] %s601
          %s603 = sshll.u32 %s595, 4
          %s604 = int_to_ptr.vmem [resolvable:$true] %s603
          %609 = dma.hbm_to_vmem [thread:$0]  %s602, 1024, %s604, %s592, 64, 64, 4
        $region80: #{tpu_custom_call.1} parent=63 // pred_fallthru
          _
        // Predicated region
        $region81: #{tpu_custom_call.1} parent=63 // pred_check
          %p610 = pneg %p282
        $region82: #{tpu_custom_call.1} parent=63 // pred_check_branch
          %612 = sbr.rel (%p610) target = $region84
        $region83: #{tpu_custom_call.1} parent=63 // pred_region
          %p613 = scmp.lt.s32.totalorder %s32, 1
          %s614 = scalar_select %p613, %s32, 1
          %s615 = scalar_lea.vmem %s10, %s614
        $region84: #{tpu_custom_call.1} parent=63 // pred_fallthru
          _
        // Predicated region
        $region85: #{tpu_custom_call.1} parent=63 // pred_check
          %p616 = pneg %p308
        $region86: #{tpu_custom_call.1} parent=63 // pred_check_branch
          %618 = sbr.rel (%p616) target = $region88
        $region87: #{tpu_custom_call.1} parent=63 // pred_region
          %p619 = scmp.lt.s32.totalorder %s32, 1
          %s620 = scalar_select %p619, %s32, 1
          %s621 = scalar_lea.vmem %s11, %s620
        $region88: #{tpu_custom_call.1} parent=63 // pred_fallthru
          _
      $region64: #{tpu_custom_call.1} parent=5 // pred_fallthru
        _
      %p622 = scmp.le.s32.totalorder 1, %s32
      %p623 = scmp.lt.s32.totalorder %s32, 3
      %p624 = pnand %p622, %p623
      %p625 = pneg %p624
      // Predicated region
      $region89: #{tpu_custom_call.1} parent=5 // pred_check
        _
      $region90: #{tpu_custom_call.1} parent=5 // pred_check_branch
        %627 = sbr.rel (%p624) target = $region92
      $region91: #{tpu_custom_call.1} parent=5 // pred_region
        %s628 = ssub.s32 %s32, 1
        %s629 = sand.u32 %s171, 1
        %s630 = scalar_lea.sflag [#allocation8], %s629
        %s631 = sand.u32 %s171, 1
        %s632 = smul.addr %s631, 64
        %s633 = scalar_lea.vmem [#allocation7], %s632
        // Predicated region
        $region93: #{tpu_custom_call.1} parent=91 // pred_check
          %p634 = pneg %p184
        $region94: #{tpu_custom_call.1} parent=91 // pred_check_branch
          %636 = sbr.rel (%p634) target = $region96
        $region95: #{tpu_custom_call.1} parent=91 // pred_region
          %638 = dma.done %s630, 1024
        $region96: #{tpu_custom_call.1} parent=91 // pred_fallthru
          _
        %s639 = sand.u32 %s37, 1
        %s640 = scalar_lea.sflag [#allocation11], %s639
        %s641 = sand.u32 %s197, 1
        %s642 = smul.addr %s641, 64
        %s643 = scalar_lea.vmem [#allocation10], %s642
        // Predicated region
        $region97: #{tpu_custom_call.1} parent=91 // pred_check
          %p644 = pneg %p210
        $region98: #{tpu_custom_call.1} parent=91 // pred_check_branch
          %646 = sbr.rel (%p644) target = $region100
        $region99: #{tpu_custom_call.1} parent=91 // pred_region
          %648 = dma.done %s640, 1024
        $region100: #{tpu_custom_call.1} parent=91 // pred_fallthru
          _
        %s649 = sand.u32 %s37, 1
        %s650 = scalar_lea.sflag [#allocation11], %s649
        %s651 = sand.u32 %s249, 1
        %s652 = smul.addr %s651, 64
        %s653 = scalar_lea.vmem [#allocation12], %s652
        // Predicated region
        $region101: #{tpu_custom_call.1} parent=91 // pred_check
          %p654 = pneg %p262
        $region102: #{tpu_custom_call.1} parent=91 // pred_check_branch
          %656 = sbr.rel (%p654) target = $region104
        $region103: #{tpu_custom_call.1} parent=91 // pred_region
          %658 = dma.done %s650, 1024
        $region104: #{tpu_custom_call.1} parent=91 // pred_fallthru
          _
        // Predicated region
        $region105: #{tpu_custom_call.1} parent=91 // pred_check
          %p659 = pneg %p377
        $region106: #{tpu_custom_call.1} parent=91 // pred_check_branch
          %661 = sbr.rel (%p659) target = $region108
        $region107: #{tpu_custom_call.1} parent=91 // pred_region
          %663 = dma.done [#allocation14], 1024
        $region108: #{tpu_custom_call.1} parent=91 // pred_fallthru
          _
        // Predicated region
        $region109: #{tpu_custom_call.1} parent=91 // pred_check
          %p664 = pneg %p419
        $region110: #{tpu_custom_call.1} parent=91 // pred_check_branch
          %666 = sbr.rel (%p664) target = $region112
        $region111: #{tpu_custom_call.1} parent=91 // pred_region
          %668 = dma.done [#allocation14], 1024
        $region112: #{tpu_custom_call.1} parent=91 // pred_fallthru
          _
        %p669 = pneg %p53
        %p670 = pneg %p50
        %p671 = pneg %p74
        %p672 = pneg %p71
        %p673 = pneg %p95
        %p674 = pneg %p92
        %p675 = pneg %p116
        %p676 = pneg %p113
        %p677 = pneg %p137
        %p678 = pneg %p134
        %p679 = pneg %p158
        %p680 = pneg %p155
        %s681 = sand.u32 %s171, 1
        %s682 = scalar_lea.sflag [#allocation8], %s681
        %s683 = sand.u32 %s171, 1
        %s684 = smul.addr %s683, 64
        %s685 = scalar_lea.vmem [#allocation7], %s684
        %p686 = pneg %p184
        %p687 = pneg %p181
        %s688 = sand.u32 %s37, 1
        %s689 = scalar_lea.sflag [#allocation11], %s688
        %s690 = sand.u32 %s197, 1
        %s691 = smul.addr %s690, 64
        %s692 = scalar_lea.vmem [#allocation10], %s691
        %p693 = pneg %p210
        %p694 = pneg %p207
        %p695 = scmp.lt.s32.totalorder %s37, 1
        %s696 = scalar_select %p695, %s37, 1
        %s697 = scalar_lea.vmem %s8, %s696
        %p698 = pneg %p236
        %p699 = pneg %p233
        %s700 = sand.u32 %s37, 1
        %s701 = scalar_lea.sflag [#allocation11], %s700
        %s702 = sand.u32 %s249, 1
        %s703 = smul.addr %s702, 64
        %s704 = scalar_lea.vmem [#allocation12], %s703
        %p705 = pneg %p262
        %p706 = pneg %p259
        %p707 = scmp.lt.s32.totalorder %s37, 1
        %s708 = scalar_select %p707, %s37, 1
        %s709 = scalar_lea.vmem %s10, %s708
        %p710 = pneg %p288
        %p711 = pneg %p285
        %p712 = scmp.lt.s32.totalorder %s37, 1
        %s713 = scalar_select %p712, %s37, 1
        %s714 = scalar_lea.vmem %s11, %s713
        %p715 = pneg %p314
        %p716 = pneg %p311
        %p717 = pneg %p335
        %p718 = pneg %p332
        %p719 = pneg %p356
        %p720 = pneg %p353
        %p721 = pneg %p377
        %p722 = pneg %p374
        %p723 = pneg %p398
        %p724 = pneg %p395
        %p725 = pneg %p419
        %p726 = pneg %p416
        %p727 = pneg %p440
        %p728 = pneg %p437
        %p729 = pneg %p461
        %p730 = pneg %p458
        %p731 = scmp.lt.s32.totalorder %s37, 1
        %s732 = scalar_select %p731, %s37, 1
        %s733 = scalar_lea.vmem %s8, %s732
        %p734 = scmp.lt.s32.totalorder %s37, 1
        %s735 = scalar_select %p734, %s37, 1
        %s736 = scalar_lea.vmem %s10, %s735
        %p737 = scmp.lt.s32.totalorder %s37, 1
        %s738 = scalar_select %p737, %s37, 1
        %s739 = scalar_lea.vmem %s11, %s738
        %p740 = scmp.eq.s32.totalorder %s37, 0
        // Predicated region
        $region113: #{tpu_custom_call.1} parent=91 // pred_check
          %p741 = pneg %p740
        $region114: #{tpu_custom_call.1} parent=91 // pred_check_branch
          %743 = sbr.rel (%p741) target = $region116
        $region115: #{tpu_custom_call.1} parent=91 // pred_region
          %v744 = vld [vmem:[%s0] sm:$0xff]
          %v745 = vld [vmem:[%s0 + $0x8] sm:$0xff]
          %v746 = vld [vmem:[%s0 + $0x10] sm:$0xff]
          %v747 = vld [vmem:[%s0 + $0x18] sm:$0xff]
          %v748 = vld [vmem:[%s0 + $0x20] sm:$0xff]
          %v749 = vld [vmem:[%s0 + $0x28] sm:$0xff]
          %v750 = vld [vmem:[%s0 + $0x30] sm:$0xff]
          %v751 = vld [vmem:[%s0 + $0x38] sm:$0xff]
          %v752 = vld [vmem:[%s0 + $0x40] sm:$0xff]
          %v753 = vld [vmem:[%s0 + $0x48] sm:$0xff]
          %v754 = vld [vmem:[%s0 + $0x50] sm:$0xff]
          %v755 = vld [vmem:[%s0 + $0x58] sm:$0xff]
          %v756 = vld [vmem:[%s0 + $0x60] sm:$0xff]
          %v757 = vld [vmem:[%s0 + $0x68] sm:$0xff]
          %v758 = vld [vmem:[%s0 + $0x70] sm:$0xff]
          %v759 = vld [vmem:[%s0 + $0x78] sm:$0xff]
          %v760 = vld [vmem:[%s1] sm:$0xff]
          %v761 = vld [vmem:[%s1 + $0x8] sm:$0xff]
          %v762 = vld [vmem:[%s1 + $0x10] sm:$0xff]
          %v763 = vld [vmem:[%s1 + $0x18] sm:$0xff]
          %v764 = vld [vmem:[%s1 + $0x20] sm:$0xff]
          %v765 = vld [vmem:[%s1 + $0x28] sm:$0xff]
          %v766 = vld [vmem:[%s1 + $0x30] sm:$0xff]
          %v767 = vld [vmem:[%s1 + $0x38] sm:$0xff]
          %v768 = vld [vmem:[%s1 + $0x40] sm:$0xff]
          %v769 = vld [vmem:[%s1 + $0x48] sm:$0xff]
          %v770 = vld [vmem:[%s1 + $0x50] sm:$0xff]
          %v771 = vld [vmem:[%s1 + $0x58] sm:$0xff]
          %v772 = vld [vmem:[%s1 + $0x60] sm:$0xff]
          %v773 = vld [vmem:[%s1 + $0x68] sm:$0xff]
          %v774 = vld [vmem:[%s1 + $0x70] sm:$0xff]
          %v775 = vld [vmem:[%s1 + $0x78] sm:$0xff]
          %v776 = vld [vmem:[%s2] sm:$0x1]
          %v778 = vperm.slane %v776, 0
          %780 = vmatpush.msra.mxu0 %v775
          %781 = vmatpush.msra.mxu0 %v774
          %782 = vmatpush.msra.mxu0 %v773
          %783 = vmatpush.msra.mxu0 %v772
          %784 = vmatpush.msra.mxu0 %v771
          %785 = vmatpush.msra.mxu0 %v770
          %786 = vmatpush.msra.mxu0 %v769
          %787 = vmatpush.msra.mxu0 %v768
          %788 = vmatpush.msra.mxu0 %v767
          %789 = vmatpush.msra.mxu0 %v766
          %790 = vmatpush.msra.mxu0 %v765
          %791 = vmatpush.msra.mxu0 %v764
          %792 = vmatpush.msra.mxu0 %v763
          %793 = vmatpush.msra.mxu0 %v762
          %794 = vmatpush.msra.mxu0 %v761
          %795 = vmatpush.msra.mxu0 %v760
          %796 = vmatmul.f32.gmra.mxu0 %v744
          %v797 = vpop.f32.mrf.mxu0
          %v798 = vadd.f32 %v778, %v797
          %799 = vmatmul.f32.gmra.mxu0 %v745
          %v800 = vpop.f32.mrf.mxu0
          %v801 = vadd.f32 %v778, %v800
          %802 = vmatmul.f32.gmra.mxu0 %v746
          %v803 = vpop.f32.mrf.mxu0
          %v804 = vadd.f32 %v778, %v803
          %805 = vmatmul.f32.gmra.mxu0 %v747
          %v806 = vpop.f32.mrf.mxu0
          %v807 = vadd.f32 %v778, %v806
          %808 = vmatmul.f32.gmra.mxu0 %v748
          %v809 = vpop.f32.mrf.mxu0
          %v810 = vadd.f32 %v778, %v809
          %811 = vmatmul.f32.gmra.mxu0 %v749
          %v812 = vpop.f32.mrf.mxu0
          %v813 = vadd.f32 %v778, %v812
          %814 = vmatmul.f32.gmra.mxu0 %v750
          %v815 = vpop.f32.mrf.mxu0
          %v816 = vadd.f32 %v778, %v815
          %817 = vmatmul.f32.gmra.mxu0 %v751
          %v818 = vpop.f32.mrf.mxu0
          %v819 = vadd.f32 %v778, %v818
          %820 = vmatmul.f32.gmra.mxu0 %v752
          %v821 = vpop.f32.mrf.mxu0
          %v822 = vadd.f32 %v778, %v821
          %823 = vmatmul.f32.gmra.mxu0 %v753
          %v824 = vpop.f32.mrf.mxu0
          %v825 = vadd.f32 %v778, %v824
          %826 = vmatmul.f32.gmra.mxu0 %v754
          %v827 = vpop.f32.mrf.mxu0
          %v828 = vadd.f32 %v778, %v827
          %829 = vmatmul.f32.gmra.mxu0 %v755
          %v830 = vpop.f32.mrf.mxu0
          %v831 = vadd.f32 %v778, %v830
          %832 = vmatmul.f32.gmra.mxu0 %v756
          %v833 = vpop.f32.mrf.mxu0
          %v834 = vadd.f32 %v778, %v833
          %835 = vmatmul.f32.gmra.mxu0 %v757
          %v836 = vpop.f32.mrf.mxu0
          %v837 = vadd.f32 %v778, %v836
          %838 = vmatmul.f32.gmra.mxu0 %v758
          %v839 = vpop.f32.mrf.mxu0
          %v840 = vadd.f32 %v778, %v839
          %841 = vmatmul.f32.gmra.mxu0 %v759
          %v842 = vpop.f32.mrf.mxu0
          %v843 = vadd.f32 %v778, %v842
          %844 = vdwg.mxu0
          %845 = vst [vmem:[#allocation2] sm:$0xff] %v798
          %846 = vst [vmem:[#allocation2 + $0x8] sm:$0xff] %v801
          %847 = vst [vmem:[#allocation2 + $0x10] sm:$0xff] %v804
          %848 = vst [vmem:[#allocation2 + $0x18] sm:$0xff] %v807
          %849 = vst [vmem:[#allocation2 + $0x20] sm:$0xff] %v810
          %850 = vst [vmem:[#allocation2 + $0x28] sm:$0xff] %v813
          %851 = vst [vmem:[#allocation2 + $0x30] sm:$0xff] %v816
          %852 = vst [vmem:[#allocation2 + $0x38] sm:$0xff] %v819
          %853 = vst [vmem:[#allocation2 + $0x40] sm:$0xff] %v822
          %854 = vst [vmem:[#allocation2 + $0x48] sm:$0xff] %v825
          %855 = vst [vmem:[#allocation2 + $0x50] sm:$0xff] %v828
          %856 = vst [vmem:[#allocation2 + $0x58] sm:$0xff] %v831
          %857 = vst [vmem:[#allocation2 + $0x60] sm:$0xff] %v834
          %858 = vst [vmem:[#allocation2 + $0x68] sm:$0xff] %v837
          %859 = vst [vmem:[#allocation2 + $0x70] sm:$0xff] %v840
          %860 = vst [vmem:[#allocation2 + $0x78] sm:$0xff] %v843
          %v861 = vpack.c.bf16 %v798, %v798
          %v862 = vpack.c.bf16 %v801, %v801
          %v863 = vpack.c.bf16 %v804, %v804
          %v864 = vpack.c.bf16 %v807, %v807
          %v865 = vpack.c.bf16 %v810, %v810
          %v866 = vpack.c.bf16 %v813, %v813
          %v867 = vpack.c.bf16 %v816, %v816
          %v868 = vpack.c.bf16 %v819, %v819
          %v869 = vpack.c.bf16 %v822, %v822
          %v870 = vpack.c.bf16 %v825, %v825
          %v871 = vpack.c.bf16 %v828, %v828
          %v872 = vpack.c.bf16 %v831, %v831
          %v873 = vpack.c.bf16 %v834, %v834
          %v874 = vpack.c.bf16 %v837, %v837
          %v875 = vpack.c.bf16 %v840, %v840
          %v876 = vpack.c.bf16 %v843, %v843
          %877 = vst [vmem:[#allocation3] sm:$0xf] %v861
          %878 = vst [vmem:[#allocation3 + $0x4] sm:$0xf] %v862
          %879 = vst [vmem:[#allocation3 + $0x8] sm:$0xf] %v863
          %880 = vst [vmem:[#allocation3 + $0xc] sm:$0xf] %v864
          %881 = vst [vmem:[#allocation3 + $0x10] sm:$0xf] %v865
          %882 = vst [vmem:[#allocation3 + $0x14] sm:$0xf] %v866
          %883 = vst [vmem:[#allocation3 + $0x18] sm:$0xf] %v867
          %884 = vst [vmem:[#allocation3 + $0x1c] sm:$0xf] %v868
          %885 = vst [vmem:[#allocation3 + $0x20] sm:$0xf] %v869
          %886 = vst [vmem:[#allocation3 + $0x24] sm:$0xf] %v870
          %887 = vst [vmem:[#allocation3 + $0x28] sm:$0xf] %v871
          %888 = vst [vmem:[#allocation3 + $0x2c] sm:$0xf] %v872
          %889 = vst [vmem:[#allocation3 + $0x30] sm:$0xf] %v873
          %890 = vst [vmem:[#allocation3 + $0x34] sm:$0xf] %v874
          %891 = vst [vmem:[#allocation3 + $0x38] sm:$0xf] %v875
          %892 = vst [vmem:[#allocation3 + $0x3c] sm:$0xf] %v876
          %v893 = vld [vmem:[%s3] sm:$0xff]
          %v894 = vld [vmem:[%s3 + $0x8] sm:$0xff]
          %v895 = vld [vmem:[%s3 + $0x10] sm:$0xff]
          %v896 = vld [vmem:[%s3 + $0x18] sm:$0xff]
          %v897 = vld [vmem:[%s3 + $0x20] sm:$0xff]
          %v898 = vld [vmem:[%s3 + $0x28] sm:$0xff]
          %v899 = vld [vmem:[%s3 + $0x30] sm:$0xff]
          %v900 = vld [vmem:[%s3 + $0x38] sm:$0xff]
          %v901 = vld [vmem:[%s3 + $0x40] sm:$0xff]
          %v902 = vld [vmem:[%s3 + $0x48] sm:$0xff]
          %v903 = vld [vmem:[%s3 + $0x50] sm:$0xff]
          %v904 = vld [vmem:[%s3 + $0x58] sm:$0xff]
          %v905 = vld [vmem:[%s3 + $0x60] sm:$0xff]
          %v906 = vld [vmem:[%s3 + $0x68] sm:$0xff]
          %v907 = vld [vmem:[%s3 + $0x70] sm:$0xff]
          %v908 = vld [vmem:[%s3 + $0x78] sm:$0xff]
          %v909 = vld [vmem:[%s4] sm:$0x1]
          %v910 = vld [vmem:[%s5] sm:$0xff]
          %v911 = vld [vmem:[%s5 + $0x8] sm:$0xff]
          %v912 = vld [vmem:[%s5 + $0x10] sm:$0xff]
          %v913 = vld [vmem:[%s5 + $0x18] sm:$0xff]
          %v914 = vld [vmem:[%s5 + $0x20] sm:$0xff]
          %v915 = vld [vmem:[%s5 + $0x28] sm:$0xff]
          %v916 = vld [vmem:[%s5 + $0x30] sm:$0xff]
          %v917 = vld [vmem:[%s5 + $0x38] sm:$0xff]
          %v918 = vld [vmem:[%s5 + $0x40] sm:$0xff]
          %v919 = vld [vmem:[%s5 + $0x48] sm:$0xff]
          %v920 = vld [vmem:[%s5 + $0x50] sm:$0xff]
          %v921 = vld [vmem:[%s5 + $0x58] sm:$0xff]
          %v922 = vld [vmem:[%s5 + $0x60] sm:$0xff]
          %v923 = vld [vmem:[%s5 + $0x68] sm:$0xff]
          %v924 = vld [vmem:[%s5 + $0x70] sm:$0xff]
          %v925 = vld [vmem:[%s5 + $0x78] sm:$0xff]
          %v926 = vlaneseq
          %v927 = vand.u32 %v926, 127
          %928 = vset.pattern.permute.xlu0 0
          %929 = vperm.xlu0 %928, %v893
          %v930 = vpop.permute.xlu0 %929
          %931 = vset.pattern.permute.xlu0 0
          %932 = vperm.xlu0 %931, %v894
          %v933 = vpop.permute.xlu0 %932
          %934 = vset.pattern.permute.xlu0 0
          %935 = vperm.xlu0 %934, %v895
          %v936 = vpop.permute.xlu0 %935
          %937 = vset.pattern.permute.xlu0 0
          %938 = vperm.xlu0 %937, %v896
          %v939 = vpop.permute.xlu0 %938
          %940 = vset.pattern.permute.xlu0 0
          %941 = vperm.xlu0 %940, %v897
          %v942 = vpop.permute.xlu0 %941
          %943 = vset.pattern.permute.xlu0 0
          %944 = vperm.xlu0 %943, %v898
          %v945 = vpop.permute.xlu0 %944
          %946 = vset.pattern.permute.xlu0 0
          %947 = vperm.xlu0 %946, %v899
          %v948 = vpop.permute.xlu0 %947
          %949 = vset.pattern.permute.xlu0 0
          %950 = vperm.xlu0 %949, %v900
          %v951 = vpop.permute.xlu0 %950
          %952 = vset.pattern.permute.xlu0 0
          %953 = vperm.xlu0 %952, %v901
          %v954 = vpop.permute.xlu0 %953
          %955 = vset.pattern.permute.xlu0 0
          %956 = vperm.xlu0 %955, %v902
          %v957 = vpop.permute.xlu0 %956
          %958 = vset.pattern.permute.xlu0 0
          %959 = vperm.xlu0 %958, %v903
          %v960 = vpop.permute.xlu0 %959
          %961 = vset.pattern.permute.xlu0 0
          %962 = vperm.xlu0 %961, %v904
          %v963 = vpop.permute.xlu0 %962
          %964 = vset.pattern.permute.xlu0 0
          %965 = vperm.xlu0 %964, %v905
          %v966 = vpop.permute.xlu0 %965
          %967 = vset.pattern.permute.xlu0 0
          %968 = vperm.xlu0 %967, %v906
          %v969 = vpop.permute.xlu0 %968
          %970 = vset.pattern.permute.xlu0 0
          %971 = vperm.xlu0 %970, %v907
          %v972 = vpop.permute.xlu0 %971
          %973 = vset.pattern.permute.xlu0 0
          %974 = vperm.xlu0 %973, %v908
          %v975 = vpop.permute.xlu0 %974
          %vm976 = vcmp.eq.s32.totalorder %v927, %v930
          %vm977 = vcmp.eq.s32.totalorder %v927, %v933
          %vm978 = vcmp.eq.s32.totalorder %v927, %v936
          %vm979 = vcmp.eq.s32.totalorder %v927, %v939
          %vm980 = vcmp.eq.s32.totalorder %v927, %v942
          %vm981 = vcmp.eq.s32.totalorder %v927, %v945
          %vm982 = vcmp.eq.s32.totalorder %v927, %v948
          %vm983 = vcmp.eq.s32.totalorder %v927, %v951
          %vm984 = vcmp.eq.s32.totalorder %v927, %v954
          %vm985 = vcmp.eq.s32.totalorder %v927, %v957
          %vm986 = vcmp.eq.s32.totalorder %v927, %v960
          %vm987 = vcmp.eq.s32.totalorder %v927, %v963
          %vm988 = vcmp.eq.s32.totalorder %v927, %v966
          %vm989 = vcmp.eq.s32.totalorder %v927, %v969
          %vm990 = vcmp.eq.s32.totalorder %v927, %v972
          %vm991 = vcmp.eq.s32.totalorder %v927, %v975
          %v992 = vsel %vm976, 1, 0
          %v993 = vsel %vm977, 1, 0
          %v994 = vsel %vm978, 1, 0
          %v995 = vsel %vm979, 1, 0
          %v996 = vsel %vm980, 1, 0
          %v997 = vsel %vm981, 1, 0
          %v998 = vsel %vm982, 1, 0
          %v999 = vsel %vm983, 1, 0
          %v1000 = vsel %vm984, 1, 0
          %v1001 = vsel %vm985, 1, 0
          %v1002 = vsel %vm986, 1, 0
          %v1003 = vsel %vm987, 1, 0
          %v1004 = vsel %vm988, 1, 0
          %v1005 = vsel %vm989, 1, 0
          %v1006 = vsel %vm990, 1, 0
          %v1007 = vsel %vm991, 1, 0
          %v1008 = vcvt.s32.f32 %v992
          %v1009 = vcvt.s32.f32 %v993
          %v1010 = vcvt.s32.f32 %v994
          %v1011 = vcvt.s32.f32 %v995
          %v1012 = vcvt.s32.f32 %v996
          %v1013 = vcvt.s32.f32 %v997
          %v1014 = vcvt.s32.f32 %v998
          %v1015 = vcvt.s32.f32 %v999
          %v1016 = vcvt.s32.f32 %v1000
          %v1017 = vcvt.s32.f32 %v1001
          %v1018 = vcvt.s32.f32 %v1002
          %v1019 = vcvt.s32.f32 %v1003
          %v1020 = vcvt.s32.f32 %v1004
          %v1021 = vcvt.s32.f32 %v1005
          %v1022 = vcvt.s32.f32 %v1006
          %v1023 = vcvt.s32.f32 %v1007
          %v1024 = vpack.c.bf16 %v1008, %v1008
          %v1025 = vpack.c.bf16 %v1009, %v1009
          %v1026 = vpack.c.bf16 %v1010, %v1010
          %v1027 = vpack.c.bf16 %v1011, %v1011
          %v1028 = vpack.c.bf16 %v1012, %v1012
          %v1029 = vpack.c.bf16 %v1013, %v1013
          %v1030 = vpack.c.bf16 %v1014, %v1014
          %v1031 = vpack.c.bf16 %v1015, %v1015
          %v1032 = vpack.c.bf16 %v1016, %v1016
          %v1033 = vpack.c.bf16 %v1017, %v1017
          %v1034 = vpack.c.bf16 %v1018, %v1018
          %v1035 = vpack.c.bf16 %v1019, %v1019
          %v1036 = vpack.c.bf16 %v1020, %v1020
          %v1037 = vpack.c.bf16 %v1021, %v1021
          %v1038 = vpack.c.bf16 %v1022, %v1022
          %v1039 = vpack.c.bf16 %v1023, %v1023
          %1040 = vst [vmem:[#allocation4] sm:$0xf] %v1024
          %1041 = vst [vmem:[#allocation4 + $0x4] sm:$0xf] %v1025
          %1042 = vst [vmem:[#allocation4 + $0x8] sm:$0xf] %v1026
          %1043 = vst [vmem:[#allocation4 + $0xc] sm:$0xf] %v1027
          %1044 = vst [vmem:[#allocation4 + $0x10] sm:$0xf] %v1028
          %1045 = vst [vmem:[#allocation4 + $0x14] sm:$0xf] %v1029
          %1046 = vst [vmem:[#allocation4 + $0x18] sm:$0xf] %v1030
          %1047 = vst [vmem:[#allocation4 + $0x1c] sm:$0xf] %v1031
          %1048 = vst [vmem:[#allocation4 + $0x20] sm:$0xf] %v1032
          %1049 = vst [vmem:[#allocation4 + $0x24] sm:$0xf] %v1033
          %1050 = vst [vmem:[#allocation4 + $0x28] sm:$0xf] %v1034
          %1051 = vst [vmem:[#allocation4 + $0x2c] sm:$0xf] %v1035
          %1052 = vst [vmem:[#allocation4 + $0x30] sm:$0xf] %v1036
          %1053 = vst [vmem:[#allocation4 + $0x34] sm:$0xf] %v1037
          %1054 = vst [vmem:[#allocation4 + $0x38] sm:$0xf] %v1038
          %1055 = vst [vmem:[#allocation4 + $0x3c] sm:$0xf] %v1039
          %v1056 = vlaneseq
          %v1057 = vshrl.u32 %v1056, 7
          %v1058 = vadd.s32 %v1057, 8
          %v1059 = vadd.s32 %v1057, 16
          %v1060 = vadd.s32 %v1057, 24
          %v1061 = vadd.s32 %v1057, 32
          %v1062 = vadd.s32 %v1057, 40
          %v1063 = vadd.s32 %v1057, 48
          %v1064 = vadd.s32 %v1057, 56
          %v1065 = vadd.s32 %v1057, 64
          %v1066 = vadd.s32 %v1057, 72
          %v1067 = vadd.s32 %v1057, 80
          %v1068 = vadd.s32 %v1057, 88
          %v1069 = vadd.s32 %v1057, 96
          %v1070 = vadd.s32 %v1057, 104
          %v1071 = vadd.s32 %v1057, 112
          %v1072 = vadd.s32 %v1057, 120
          %v1073 = vperm.slane %v909, 0
          %vm1074 = vcmp.eq.s32.totalorder %v1057, %v1073
          %vm1075 = vcmp.eq.s32.totalorder %v1058, %v1073
          %vm1076 = vcmp.eq.s32.totalorder %v1059, %v1073
          %vm1077 = vcmp.eq.s32.totalorder %v1060, %v1073
          %vm1078 = vcmp.eq.s32.totalorder %v1061, %v1073
          %vm1079 = vcmp.eq.s32.totalorder %v1062, %v1073
          %vm1080 = vcmp.eq.s32.totalorder %v1063, %v1073
          %vm1081 = vcmp.eq.s32.totalorder %v1064, %v1073
          %vm1082 = vcmp.eq.s32.totalorder %v1065, %v1073
          %vm1083 = vcmp.eq.s32.totalorder %v1066, %v1073
          %vm1084 = vcmp.eq.s32.totalorder %v1067, %v1073
          %vm1085 = vcmp.eq.s32.totalorder %v1068, %v1073
          %vm1086 = vcmp.eq.s32.totalorder %v1069, %v1073
          %vm1087 = vcmp.eq.s32.totalorder %v1070, %v1073
          %vm1088 = vcmp.eq.s32.totalorder %v1071, %v1073
          %vm1089 = vcmp.eq.s32.totalorder %v1072, %v1073
          %v1090 = vsel %vm1074, 1, 0
          %v1091 = vsel %vm1075, 1, 0
          %v1092 = vsel %vm1076, 1, 0
          %v1093 = vsel %vm1077, 1, 0
          %v1094 = vsel %vm1078, 1, 0
          %v1095 = vsel %vm1079, 1, 0
          %v1096 = vsel %vm1080, 1, 0
          %v1097 = vsel %vm1081, 1, 0
          %v1098 = vsel %vm1082, 1, 0
          %v1099 = vsel %vm1083, 1, 0
          %v1100 = vsel %vm1084, 1, 0
          %v1101 = vsel %vm1085, 1, 0
          %v1102 = vsel %vm1086, 1, 0
          %v1103 = vsel %vm1087, 1, 0
          %v1104 = vsel %vm1088, 1, 0
          %v1105 = vsel %vm1089, 1, 0
          %v1106 = vcvt.s32.f32 %v1090
          %v1107 = vcvt.s32.f32 %v1091
          %v1108 = vcvt.s32.f32 %v1092
          %v1109 = vcvt.s32.f32 %v1093
          %v1110 = vcvt.s32.f32 %v1094
          %v1111 = vcvt.s32.f32 %v1095
          %v1112 = vcvt.s32.f32 %v1096
          %v1113 = vcvt.s32.f32 %v1097
          %v1114 = vcvt.s32.f32 %v1098
          %v1115 = vcvt.s32.f32 %v1099
          %v1116 = vcvt.s32.f32 %v1100
          %v1117 = vcvt.s32.f32 %v1101
          %v1118 = vcvt.s32.f32 %v1102
          %v1119 = vcvt.s32.f32 %v1103
          %v1120 = vcvt.s32.f32 %v1104
          %v1121 = vcvt.s32.f32 %v1105
          %v1122 = vpack.c.bf16 %v1106, %v1106
          %v1123 = vpack.c.bf16 %v1107, %v1107
          %v1124 = vpack.c.bf16 %v1108, %v1108
          %v1125 = vpack.c.bf16 %v1109, %v1109
          %v1126 = vpack.c.bf16 %v1110, %v1110
          %v1127 = vpack.c.bf16 %v1111, %v1111
          %v1128 = vpack.c.bf16 %v1112, %v1112
          %v1129 = vpack.c.bf16 %v1113, %v1113
          %v1130 = vpack.c.bf16 %v1114, %v1114
          %v1131 = vpack.c.bf16 %v1115, %v1115
          %v1132 = vpack.c.bf16 %v1116, %v1116
          %v1133 = vpack.c.bf16 %v1117, %v1117
          %v1134 = vpack.c.bf16 %v1118, %v1118
          %v1135 = vpack.c.bf16 %v1119, %v1119
          %v1136 = vpack.c.bf16 %v1120, %v1120
          %v1137 = vpack.c.bf16 %v1121, %v1121
          %1138 = vst [vmem:[#allocation5] sm:$0xf] %v1122
          %1139 = vst [vmem:[#allocation5 + $0x4] sm:$0xf] %v1123
          %1140 = vst [vmem:[#allocation5 + $0x8] sm:$0xf] %v1124
          %1141 = vst [vmem:[#allocation5 + $0xc] sm:$0xf] %v1125
          %1142 = vst [vmem:[#allocation5 + $0x10] sm:$0xf] %v1126
          %1143 = vst [vmem:[#allocation5 + $0x14] sm:$0xf] %v1127
          %1144 = vst [vmem:[#allocation5 + $0x18] sm:$0xf] %v1128
          %1145 = vst [vmem:[#allocation5 + $0x1c] sm:$0xf] %v1129
          %1146 = vst [vmem:[#allocation5 + $0x20] sm:$0xf] %v1130
          %1147 = vst [vmem:[#allocation5 + $0x24] sm:$0xf] %v1131
          %1148 = vst [vmem:[#allocation5 + $0x28] sm:$0xf] %v1132
          %1149 = vst [vmem:[#allocation5 + $0x2c] sm:$0xf] %v1133
          %1150 = vst [vmem:[#allocation5 + $0x30] sm:$0xf] %v1134
          %1151 = vst [vmem:[#allocation5 + $0x34] sm:$0xf] %v1135
          %1152 = vst [vmem:[#allocation5 + $0x38] sm:$0xf] %v1136
          %1153 = vst [vmem:[#allocation5 + $0x3c] sm:$0xf] %v1137
          %1154 = vset.pattern.permute.xlu0 0
          %1155 = vperm.xlu0 %1154, %v910
          %v1156 = vpop.permute.xlu0 %1155
          %1157 = vset.pattern.permute.xlu0 0
          %1158 = vperm.xlu0 %1157, %v911
          %v1159 = vpop.permute.xlu0 %1158
          %1160 = vset.pattern.permute.xlu0 0
          %1161 = vperm.xlu0 %1160, %v912
          %v1162 = vpop.permute.xlu0 %1161
          %1163 = vset.pattern.permute.xlu0 0
          %1164 = vperm.xlu0 %1163, %v913
          %v1165 = vpop.permute.xlu0 %1164
          %1166 = vset.pattern.permute.xlu0 0
          %1167 = vperm.xlu0 %1166, %v914
          %v1168 = vpop.permute.xlu0 %1167
          %1169 = vset.pattern.permute.xlu0 0
          %1170 = vperm.xlu0 %1169, %v915
          %v1171 = vpop.permute.xlu0 %1170
          %1172 = vset.pattern.permute.xlu0 0
          %1173 = vperm.xlu0 %1172, %v916
          %v1174 = vpop.permute.xlu0 %1173
          %1175 = vset.pattern.permute.xlu0 0
          %1176 = vperm.xlu0 %1175, %v917
          %v1177 = vpop.permute.xlu0 %1176
          %1178 = vset.pattern.permute.xlu0 0
          %1179 = vperm.xlu0 %1178, %v918
          %v1180 = vpop.permute.xlu0 %1179
          %1181 = vset.pattern.permute.xlu0 0
          %1182 = vperm.xlu0 %1181, %v919
          %v1183 = vpop.permute.xlu0 %1182
          %1184 = vset.pattern.permute.xlu0 0
          %1185 = vperm.xlu0 %1184, %v920
          %v1186 = vpop.permute.xlu0 %1185
          %1187 = vset.pattern.permute.xlu0 0
          %1188 = vperm.xlu0 %1187, %v921
          %v1189 = vpop.permute.xlu0 %1188
          %1190 = vset.pattern.permute.xlu0 0
          %1191 = vperm.xlu0 %1190, %v922
          %v1192 = vpop.permute.xlu0 %1191
          %1193 = vset.pattern.permute.xlu0 0
          %1194 = vperm.xlu0 %1193, %v923
          %v1195 = vpop.permute.xlu0 %1194
          %1196 = vset.pattern.permute.xlu0 0
          %1197 = vperm.xlu0 %1196, %v924
          %v1198 = vpop.permute.xlu0 %1197
          %1199 = vset.pattern.permute.xlu0 0
          %1200 = vperm.xlu0 %1199, %v925
          %v1201 = vpop.permute.xlu0 %1200
          %vm1202 = vcmp.eq.s32.totalorder %v927, %v1156
          %vm1203 = vcmp.eq.s32.totalorder %v927, %v1159
          %vm1204 = vcmp.eq.s32.totalorder %v927, %v1162
          %vm1205 = vcmp.eq.s32.totalorder %v927, %v1165
          %vm1206 = vcmp.eq.s32.totalorder %v927, %v1168
          %vm1207 = vcmp.eq.s32.totalorder %v927, %v1171
          %vm1208 = vcmp.eq.s32.totalorder %v927, %v1174
          %vm1209 = vcmp.eq.s32.totalorder %v927, %v1177
          %vm1210 = vcmp.eq.s32.totalorder %v927, %v1180
          %vm1211 = vcmp.eq.s32.totalorder %v927, %v1183
          %vm1212 = vcmp.eq.s32.totalorder %v927, %v1186
          %vm1213 = vcmp.eq.s32.totalorder %v927, %v1189
          %vm1214 = vcmp.eq.s32.totalorder %v927, %v1192
          %vm1215 = vcmp.eq.s32.totalorder %v927, %v1195
          %vm1216 = vcmp.eq.s32.totalorder %v927, %v1198
          %vm1217 = vcmp.eq.s32.totalorder %v927, %v1201
          %v1218 = vsel %vm1202, 1, 0
          %v1219 = vsel %vm1203, 1, 0
          %v1220 = vsel %vm1204, 1, 0
          %v1221 = vsel %vm1205, 1, 0
          %v1222 = vsel %vm1206, 1, 0
          %v1223 = vsel %vm1207, 1, 0
          %v1224 = vsel %vm1208, 1, 0
          %v1225 = vsel %vm1209, 1, 0
          %v1226 = vsel %vm1210, 1, 0
          %v1227 = vsel %vm1211, 1, 0
          %v1228 = vsel %vm1212, 1, 0
          %v1229 = vsel %vm1213, 1, 0
          %v1230 = vsel %vm1214, 1, 0
          %v1231 = vsel %vm1215, 1, 0
          %v1232 = vsel %vm1216, 1, 0
          %v1233 = vsel %vm1217, 1, 0
          %v1234 = vcvt.s32.f32 %v1218
          %v1235 = vcvt.s32.f32 %v1219
          %v1236 = vcvt.s32.f32 %v1220
          %v1237 = vcvt.s32.f32 %v1221
          %v1238 = vcvt.s32.f32 %v1222
          %v1239 = vcvt.s32.f32 %v1223
          %v1240 = vcvt.s32.f32 %v1224
          %v1241 = vcvt.s32.f32 %v1225
          %v1242 = vcvt.s32.f32 %v1226
          %v1243 = vcvt.s32.f32 %v1227
          %v1244 = vcvt.s32.f32 %v1228
          %v1245 = vcvt.s32.f32 %v1229
          %v1246 = vcvt.s32.f32 %v1230
          %v1247 = vcvt.s32.f32 %v1231
          %v1248 = vcvt.s32.f32 %v1232
          %v1249 = vcvt.s32.f32 %v1233
          %v1250 = vpack.c.bf16 %v1234, %v1234
          %v1251 = vpack.c.bf16 %v1235, %v1235
          %v1252 = vpack.c.bf16 %v1236, %v1236
          %v1253 = vpack.c.bf16 %v1237, %v1237
          %v1254 = vpack.c.bf16 %v1238, %v1238
          %v1255 = vpack.c.bf16 %v1239, %v1239
          %v1256 = vpack.c.bf16 %v1240, %v1240
          %v1257 = vpack.c.bf16 %v1241, %v1241
          %v1258 = vpack.c.bf16 %v1242, %v1242
          %v1259 = vpack.c.bf16 %v1243, %v1243
          %v1260 = vpack.c.bf16 %v1244, %v1244
          %v1261 = vpack.c.bf16 %v1245, %v1245
          %v1262 = vpack.c.bf16 %v1246, %v1246
          %v1263 = vpack.c.bf16 %v1247, %v1247
          %v1264 = vpack.c.bf16 %v1248, %v1248
          %v1265 = vpack.c.bf16 %v1249, %v1249
          %1266 = vst [vmem:[#allocation6] sm:$0xf] %v1250
          %1267 = vst [vmem:[#allocation6 + $0x4] sm:$0xf] %v1251
          %1268 = vst [vmem:[#allocation6 + $0x8] sm:$0xf] %v1252
          %1269 = vst [vmem:[#allocation6 + $0xc] sm:$0xf] %v1253
          %1270 = vst [vmem:[#allocation6 + $0x10] sm:$0xf] %v1254
          %1271 = vst [vmem:[#allocation6 + $0x14] sm:$0xf] %v1255
          %1272 = vst [vmem:[#allocation6 + $0x18] sm:$0xf] %v1256
          %1273 = vst [vmem:[#allocation6 + $0x1c] sm:$0xf] %v1257
          %1274 = vst [vmem:[#allocation6 + $0x20] sm:$0xf] %v1258
          %1275 = vst [vmem:[#allocation6 + $0x24] sm:$0xf] %v1259
          %1276 = vst [vmem:[#allocation6 + $0x28] sm:$0xf] %v1260
          %1277 = vst [vmem:[#allocation6 + $0x2c] sm:$0xf] %v1261
          %1278 = vst [vmem:[#allocation6 + $0x30] sm:$0xf] %v1262
          %1279 = vst [vmem:[#allocation6 + $0x34] sm:$0xf] %v1263
          %1280 = vst [vmem:[#allocation6 + $0x38] sm:$0xf] %v1264
          %1281 = vst [vmem:[#allocation6 + $0x3c] sm:$0xf] %v1265
        $region116: #{tpu_custom_call.1} parent=91 // pred_fallthru
          _
        %v1282 = vld [vmem:[#allocation2] sm:$0xff]
        %v1283 = vld [vmem:[#allocation2 + $0x8] sm:$0xff]
        %v1284 = vld [vmem:[#allocation2 + $0x10] sm:$0xff]
        %v1285 = vld [vmem:[#allocation2 + $0x18] sm:$0xff]
        %v1286 = vld [vmem:[#allocation2 + $0x20] sm:$0xff]
        %v1287 = vld [vmem:[#allocation2 + $0x28] sm:$0xff]
        %v1288 = vld [vmem:[#allocation2 + $0x30] sm:$0xff]
        %v1289 = vld [vmem:[#allocation2 + $0x38] sm:$0xff]
        %v1290 = vld [vmem:[#allocation2 + $0x40] sm:$0xff]
        %v1291 = vld [vmem:[#allocation2 + $0x48] sm:$0xff]
        %v1292 = vld [vmem:[#allocation2 + $0x50] sm:$0xff]
        %v1293 = vld [vmem:[#allocation2 + $0x58] sm:$0xff]
        %v1294 = vld [vmem:[#allocation2 + $0x60] sm:$0xff]
        %v1295 = vld [vmem:[#allocation2 + $0x68] sm:$0xff]
        %v1296 = vld [vmem:[#allocation2 + $0x70] sm:$0xff]
        %v1297 = vld [vmem:[#allocation2 + $0x78] sm:$0xff]
        %v1298 = vld [vmem:[#allocation3] sm:$0xf]
        %v1299 = vld [vmem:[#allocation3 + $0x4] sm:$0xf]
        %v1300 = vld [vmem:[#allocation3 + $0x8] sm:$0xf]
        %v1301 = vld [vmem:[#allocation3 + $0xc] sm:$0xf]
        %v1302 = vld [vmem:[#allocation3 + $0x10] sm:$0xf]
        %v1303 = vld [vmem:[#allocation3 + $0x14] sm:$0xf]
        %v1304 = vld [vmem:[#allocation3 + $0x18] sm:$0xf]
        %v1305 = vld [vmem:[#allocation3 + $0x1c] sm:$0xf]
        %v1306 = vld [vmem:[#allocation3 + $0x20] sm:$0xf]
        %v1307 = vld [vmem:[#allocation3 + $0x24] sm:$0xf]
        %v1308 = vld [vmem:[#allocation3 + $0x28] sm:$0xf]
        %v1309 = vld [vmem:[#allocation3 + $0x2c] sm:$0xf]
        %v1310 = vld [vmem:[#allocation3 + $0x30] sm:$0xf]
        %v1311 = vld [vmem:[#allocation3 + $0x34] sm:$0xf]
        %v1312 = vld [vmem:[#allocation3 + $0x38] sm:$0xf]
        %v1313 = vld [vmem:[#allocation3 + $0x3c] sm:$0xf]
        %v1314 = vld [vmem:[#allocation6] sm:$0xf]
        %v1315 = vld [vmem:[#allocation6 + $0x4] sm:$0xf]
        %v1316 = vld [vmem:[#allocation6 + $0x8] sm:$0xf]
        %v1317 = vld [vmem:[#allocation6 + $0xc] sm:$0xf]
        %v1318 = vld [vmem:[#allocation6 + $0x10] sm:$0xf]
        %v1319 = vld [vmem:[#allocation6 + $0x14] sm:$0xf]
        %v1320 = vld [vmem:[#allocation6 + $0x18] sm:$0xf]
        %v1321 = vld [vmem:[#allocation6 + $0x1c] sm:$0xf]
        %v1322 = vld [vmem:[#allocation6 + $0x20] sm:$0xf]
        %v1323 = vld [vmem:[#allocation6 + $0x24] sm:$0xf]
        %v1324 = vld [vmem:[#allocation6 + $0x28] sm:$0xf]
        %v1325 = vld [vmem:[#allocation6 + $0x2c] sm:$0xf]
        %v1326 = vld [vmem:[#allocation6 + $0x30] sm:$0xf]
        %v1327 = vld [vmem:[#allocation6 + $0x34] sm:$0xf]
        %v1328 = vld [vmem:[#allocation6 + $0x38] sm:$0xf]
        %v1329 = vld [vmem:[#allocation6 + $0x3c] sm:$0xf]
        %v1330 = vld [vmem:[%s633] sm:$0xf]
        %v1331 = vld [vmem:[%s633 + $0x4] sm:$0xf]
        %v1332 = vld [vmem:[%s633 + $0x8] sm:$0xf]
        %v1333 = vld [vmem:[%s633 + $0xc] sm:$0xf]
        %v1334 = vld [vmem:[%s633 + $0x10] sm:$0xf]
        %v1335 = vld [vmem:[%s633 + $0x14] sm:$0xf]
        %v1336 = vld [vmem:[%s633 + $0x18] sm:$0xf]
        %v1337 = vld [vmem:[%s633 + $0x1c] sm:$0xf]
        %v1338 = vld [vmem:[%s633 + $0x20] sm:$0xf]
        %v1339 = vld [vmem:[%s633 + $0x24] sm:$0xf]
        %v1340 = vld [vmem:[%s633 + $0x28] sm:$0xf]
        %v1341 = vld [vmem:[%s633 + $0x2c] sm:$0xf]
        %v1342 = vld [vmem:[%s633 + $0x30] sm:$0xf]
        %v1343 = vld [vmem:[%s633 + $0x34] sm:$0xf]
        %v1344 = vld [vmem:[%s633 + $0x38] sm:$0xf]
        %v1345 = vld [vmem:[%s633 + $0x3c] sm:$0xf]
        %v1362 = vunpack.c.l.b16 %v1314
        %v1363 = vunpack.c.l.b16 %v1315
        %v1364 = vunpack.c.l.b16 %v1316
        %v1365 = vunpack.c.l.b16 %v1317
        %v1366 = vunpack.c.l.b16 %v1318
        %v1367 = vunpack.c.l.b16 %v1319
        %v1368 = vunpack.c.l.b16 %v1320
        %v1369 = vunpack.c.l.b16 %v1321
        %v1370 = vunpack.c.l.b16 %v1322
        %v1371 = vunpack.c.l.b16 %v1323
        %v1372 = vunpack.c.l.b16 %v1324
        %v1373 = vunpack.c.l.b16 %v1325
        %v1374 = vunpack.c.l.b16 %v1326
        %v1375 = vunpack.c.l.b16 %v1327
        %v1376 = vunpack.c.l.b16 %v1328
        %v1377 = vunpack.c.l.b16 %v1329
        %v1378 = vpack.c.b16 %v1363, %v1362
        %v1379 = vpack.c.b16 %v1365, %v1364
        %v1380 = vpack.c.b16 %v1367, %v1366
        %v1381 = vpack.c.b16 %v1369, %v1368
        %v1382 = vpack.c.b16 %v1371, %v1370
        %v1383 = vpack.c.b16 %v1373, %v1372
        %v1384 = vpack.c.b16 %v1375, %v1374
        %v1385 = vpack.c.b16 %v1377, %v1376
        %v1410 = vunpack.c.l.b16 %v1330
        %v1411 = vunpack.c.l.b16 %v1331
        %v1412 = vunpack.c.l.b16 %v1332
        %v1413 = vunpack.c.l.b16 %v1333
        %v1414 = vunpack.c.l.b16 %v1334
        %v1415 = vunpack.c.l.b16 %v1335
        %v1416 = vunpack.c.l.b16 %v1336
        %v1417 = vunpack.c.l.b16 %v1337
        %v1418 = vunpack.c.l.b16 %v1338
        %v1419 = vunpack.c.l.b16 %v1339
        %v1420 = vunpack.c.l.b16 %v1340
        %v1421 = vunpack.c.l.b16 %v1341
        %v1422 = vunpack.c.l.b16 %v1342
        %v1423 = vunpack.c.l.b16 %v1343
        %v1424 = vunpack.c.l.b16 %v1344
        %v1425 = vunpack.c.l.b16 %v1345
        %v1426 = vpack.c.b16 %v1411, %v1410
        %v1427 = vpack.c.b16 %v1413, %v1412
        %v1428 = vpack.c.b16 %v1415, %v1414
        %v1429 = vpack.c.b16 %v1417, %v1416
        %v1430 = vpack.c.b16 %v1419, %v1418
        %v1431 = vpack.c.b16 %v1421, %v1420
        %v1432 = vpack.c.b16 %v1423, %v1422
        %v1433 = vpack.c.b16 %v1425, %v1424
        %1442 = vmatpush.bf16.msra.mxu0 %v1433
        %1443 = vmatpush.bf16.msra.mxu0 %v1432
        %1444 = vmatpush.bf16.msra.mxu0 %v1431
        %1445 = vmatpush.bf16.msra.mxu0 %v1430
        %1446 = vmatpush.bf16.msra.mxu0 %v1429
        %1447 = vmatpush.bf16.msra.mxu0 %v1428
        %1448 = vmatpush.bf16.msra.mxu0 %v1427
        %1449 = vmatpush.bf16.msra.mxu0 %v1426
        %1450 = vmatmul.bf16.gmra.mxu0 %v1378
        %v1451 = vpop.f32.mrf.mxu0
        %v1452 = vadd.f32 0.0, %v1451
        %v1453 = vpop.f32.mrf.mxu0
        %v1454 = vadd.f32 0.0, %v1453
        %1455 = vmatmul.bf16.gmra.mxu0 %v1379
        %v1456 = vpop.f32.mrf.mxu0
        %v1457 = vadd.f32 0.0, %v1456
        %v1458 = vpop.f32.mrf.mxu0
        %v1459 = vadd.f32 0.0, %v1458
        %1460 = vmatmul.bf16.gmra.mxu0 %v1380
        %v1461 = vpop.f32.mrf.mxu0
        %v1462 = vadd.f32 0.0, %v1461
        %v1463 = vpop.f32.mrf.mxu0
        %v1464 = vadd.f32 0.0, %v1463
        %1465 = vmatmul.bf16.gmra.mxu0 %v1381
        %v1466 = vpop.f32.mrf.mxu0
        %v1467 = vadd.f32 0.0, %v1466
        %v1468 = vpop.f32.mrf.mxu0
        %v1469 = vadd.f32 0.0, %v1468
        %1470 = vmatmul.bf16.gmra.mxu0 %v1382
        %v1471 = vpop.f32.mrf.mxu0
        %v1472 = vadd.f32 0.0, %v1471
        %v1473 = vpop.f32.mrf.mxu0
        %v1474 = vadd.f32 0.0, %v1473
        %1475 = vmatmul.bf16.gmra.mxu0 %v1383
        %v1476 = vpop.f32.mrf.mxu0
        %v1477 = vadd.f32 0.0, %v1476
        %v1478 = vpop.f32.mrf.mxu0
        %v1479 = vadd.f32 0.0, %v1478
        %1480 = vmatmul.bf16.gmra.mxu0 %v1384
        %v1481 = vpop.f32.mrf.mxu0
        %v1482 = vadd.f32 0.0, %v1481
        %v1483 = vpop.f32.mrf.mxu0
        %v1484 = vadd.f32 0.0, %v1483
        %1485 = vmatmul.bf16.gmra.mxu0 %v1385
        %v1486 = vpop.f32.mrf.mxu0
        %v1487 = vadd.f32 0.0, %v1486
        %v1488 = vpop.f32.mrf.mxu0
        %v1489 = vadd.f32 0.0, %v1488
        %1490 = vdwg.mxu0
        %v1491 = vld [vmem:[#allocation4] sm:$0xf]
        %v1492 = vld [vmem:[#allocation4 + $0x4] sm:$0xf]
        %v1493 = vld [vmem:[#allocation4 + $0x8] sm:$0xf]
        %v1494 = vld [vmem:[#allocation4 + $0xc] sm:$0xf]
        %v1495 = vld [vmem:[#allocation4 + $0x10] sm:$0xf]
        %v1496 = vld [vmem:[#allocation4 + $0x14] sm:$0xf]
        %v1497 = vld [vmem:[#allocation4 + $0x18] sm:$0xf]
        %v1498 = vld [vmem:[#allocation4 + $0x1c] sm:$0xf]
        %v1499 = vld [vmem:[#allocation4 + $0x20] sm:$0xf]
        %v1500 = vld [vmem:[#allocation4 + $0x24] sm:$0xf]
        %v1501 = vld [vmem:[#allocation4 + $0x28] sm:$0xf]
        %v1502 = vld [vmem:[#allocation4 + $0x2c] sm:$0xf]
        %v1503 = vld [vmem:[#allocation4 + $0x30] sm:$0xf]
        %v1504 = vld [vmem:[#allocation4 + $0x34] sm:$0xf]
        %v1505 = vld [vmem:[#allocation4 + $0x38] sm:$0xf]
        %v1506 = vld [vmem:[#allocation4 + $0x3c] sm:$0xf]
        %v1523 = vunpack.c.l.b16 %v1491
        %v1524 = vunpack.c.l.b16 %v1492
        %v1525 = vunpack.c.l.b16 %v1493
        %v1526 = vunpack.c.l.b16 %v1494
        %v1527 = vunpack.c.l.b16 %v1495
        %v1528 = vunpack.c.l.b16 %v1496
        %v1529 = vunpack.c.l.b16 %v1497
        %v1530 = vunpack.c.l.b16 %v1498
        %v1531 = vunpack.c.l.b16 %v1499
        %v1532 = vunpack.c.l.b16 %v1500
        %v1533 = vunpack.c.l.b16 %v1501
        %v1534 = vunpack.c.l.b16 %v1502
        %v1535 = vunpack.c.l.b16 %v1503
        %v1536 = vunpack.c.l.b16 %v1504
        %v1537 = vunpack.c.l.b16 %v1505
        %v1538 = vunpack.c.l.b16 %v1506
        %v1539 = vpack.c.b16 %v1524, %v1523
        %v1540 = vpack.c.b16 %v1526, %v1525
        %v1541 = vpack.c.b16 %v1528, %v1527
        %v1542 = vpack.c.b16 %v1530, %v1529
        %v1543 = vpack.c.b16 %v1532, %v1531
        %v1544 = vpack.c.b16 %v1534, %v1533
        %v1545 = vpack.c.b16 %v1536, %v1535
        %v1546 = vpack.c.b16 %v1538, %v1537
        %v1571 = vunpack.c.l.b16 %v1298
        %v1572 = vunpack.c.l.b16 %v1299
        %v1573 = vunpack.c.l.b16 %v1300
        %v1574 = vunpack.c.l.b16 %v1301
        %v1575 = vunpack.c.l.b16 %v1302
        %v1576 = vunpack.c.l.b16 %v1303
        %v1577 = vunpack.c.l.b16 %v1304
        %v1578 = vunpack.c.l.b16 %v1305
        %v1579 = vunpack.c.l.b16 %v1306
        %v1580 = vunpack.c.l.b16 %v1307
        %v1581 = vunpack.c.l.b16 %v1308
        %v1582 = vunpack.c.l.b16 %v1309
        %v1583 = vunpack.c.l.b16 %v1310
        %v1584 = vunpack.c.l.b16 %v1311
        %v1585 = vunpack.c.l.b16 %v1312
        %v1586 = vunpack.c.l.b16 %v1313
        %v1587 = vpack.c.b16 %v1572, %v1571
        %v1588 = vpack.c.b16 %v1574, %v1573
        %v1589 = vpack.c.b16 %v1576, %v1575
        %v1590 = vpack.c.b16 %v1578, %v1577
        %v1591 = vpack.c.b16 %v1580, %v1579
        %v1592 = vpack.c.b16 %v1582, %v1581
        %v1593 = vpack.c.b16 %v1584, %v1583
        %v1594 = vpack.c.b16 %v1586, %v1585
        %1603 = vmatpush.bf16.msra.mxu0 %v1594
        %1604 = vmatpush.bf16.msra.mxu0 %v1593
        %1605 = vmatpush.bf16.msra.mxu0 %v1592
        %1606 = vmatpush.bf16.msra.mxu0 %v1591
        %1607 = vmatpush.bf16.msra.mxu0 %v1590
        %1608 = vmatpush.bf16.msra.mxu0 %v1589
        %1609 = vmatpush.bf16.msra.mxu0 %v1588
        %1610 = vmatpush.bf16.msra.mxu0 %v1587
        %1611 = vmatmul.bf16.gmra.mxu0 %v1539
        %v1612 = vpop.f32.mrf.mxu0
        %v1613 = vadd.f32 %v1452, %v1612
        %v1614 = vpop.f32.mrf.mxu0
        %v1615 = vadd.f32 %v1454, %v1614
        %1616 = vmatmul.bf16.gmra.mxu0 %v1540
        %v1617 = vpop.f32.mrf.mxu0
        %v1618 = vadd.f32 %v1457, %v1617
        %v1619 = vpop.f32.mrf.mxu0
        %v1620 = vadd.f32 %v1459, %v1619
        %1621 = vmatmul.bf16.gmra.mxu0 %v1541
        %v1622 = vpop.f32.mrf.mxu0
        %v1623 = vadd.f32 %v1462, %v1622
        %v1624 = vpop.f32.mrf.mxu0
        %v1625 = vadd.f32 %v1464, %v1624
        %1626 = vmatmul.bf16.gmra.mxu0 %v1542
        %v1627 = vpop.f32.mrf.mxu0
        %v1628 = vadd.f32 %v1467, %v1627
        %v1629 = vpop.f32.mrf.mxu0
        %v1630 = vadd.f32 %v1469, %v1629
        %1631 = vmatmul.bf16.gmra.mxu0 %v1543
        %v1632 = vpop.f32.mrf.mxu0
        %v1633 = vadd.f32 %v1472, %v1632
        %v1634 = vpop.f32.mrf.mxu0
        %v1635 = vadd.f32 %v1474, %v1634
        %1636 = vmatmul.bf16.gmra.mxu0 %v1544
        %v1637 = vpop.f32.mrf.mxu0
        %v1638 = vadd.f32 %v1477, %v1637
        %v1639 = vpop.f32.mrf.mxu0
        %v1640 = vadd.f32 %v1479, %v1639
        %1641 = vmatmul.bf16.gmra.mxu0 %v1545
        %v1642 = vpop.f32.mrf.mxu0
        %v1643 = vadd.f32 %v1482, %v1642
        %v1644 = vpop.f32.mrf.mxu0
        %v1645 = vadd.f32 %v1484, %v1644
        %1646 = vmatmul.bf16.gmra.mxu0 %v1546
        %v1647 = vpop.f32.mrf.mxu0
        %v1648 = vadd.f32 %v1487, %v1647
        %v1649 = vpop.f32.mrf.mxu0
        %v1650 = vadd.f32 %v1489, %v1649
        %1651 = vdwg.mxu0
        %v1652 = vmax.f32 %v1613, 0.0
        %v1653 = vmax.f32 %v1615, 0.0
        %v1654 = vmax.f32 %v1618, 0.0
        %v1655 = vmax.f32 %v1620, 0.0
        %v1656 = vmax.f32 %v1623, 0.0
        %v1657 = vmax.f32 %v1625, 0.0
        %v1658 = vmax.f32 %v1628, 0.0
        %v1659 = vmax.f32 %v1630, 0.0
        %v1660 = vmax.f32 %v1633, 0.0
        %v1661 = vmax.f32 %v1635, 0.0
        %v1662 = vmax.f32 %v1638, 0.0
        %v1663 = vmax.f32 %v1640, 0.0
        %v1664 = vmax.f32 %v1643, 0.0
        %v1665 = vmax.f32 %v1645, 0.0
        %v1666 = vmax.f32 %v1648, 0.0
        %v1667 = vmax.f32 %v1650, 0.0
        %v1668 = vpack.c.bf16 %v1653, %v1652
        %v1669 = vpack.c.bf16 %v1655, %v1654
        %v1670 = vpack.c.bf16 %v1657, %v1656
        %v1671 = vpack.c.bf16 %v1659, %v1658
        %v1672 = vpack.c.bf16 %v1661, %v1660
        %v1673 = vpack.c.bf16 %v1663, %v1662
        %v1674 = vpack.c.bf16 %v1665, %v1664
        %v1675 = vpack.c.bf16 %v1667, %v1666
        %v1676 = vld [vmem:[#allocation5] sm:$0xf]
        %v1677 = vld [vmem:[#allocation5 + $0x4] sm:$0xf]
        %v1678 = vld [vmem:[#allocation5 + $0x8] sm:$0xf]
        %v1679 = vld [vmem:[#allocation5 + $0xc] sm:$0xf]
        %v1680 = vld [vmem:[#allocation5 + $0x10] sm:$0xf]
        %v1681 = vld [vmem:[#allocation5 + $0x14] sm:$0xf]
        %v1682 = vld [vmem:[#allocation5 + $0x18] sm:$0xf]
        %v1683 = vld [vmem:[#allocation5 + $0x1c] sm:$0xf]
        %v1684 = vld [vmem:[#allocation5 + $0x20] sm:$0xf]
        %v1685 = vld [vmem:[#allocation5 + $0x24] sm:$0xf]
        %v1686 = vld [vmem:[#allocation5 + $0x28] sm:$0xf]
        %v1687 = vld [vmem:[#allocation5 + $0x2c] sm:$0xf]
        %v1688 = vld [vmem:[#allocation5 + $0x30] sm:$0xf]
        %v1689 = vld [vmem:[#allocation5 + $0x34] sm:$0xf]
        %v1690 = vld [vmem:[#allocation5 + $0x38] sm:$0xf]
        %v1691 = vld [vmem:[#allocation5 + $0x3c] sm:$0xf]
        %v1708 = vunpack.c.l.b16 %v1676
        %v1709 = vunpack.c.l.b16 %v1677
        %v1710 = vunpack.c.l.b16 %v1678
        %v1711 = vunpack.c.l.b16 %v1679
        %v1712 = vunpack.c.l.b16 %v1680
        %v1713 = vunpack.c.l.b16 %v1681
        %v1714 = vunpack.c.l.b16 %v1682
        %v1715 = vunpack.c.l.b16 %v1683
        %v1716 = vunpack.c.l.b16 %v1684
        %v1717 = vunpack.c.l.b16 %v1685
        %v1718 = vunpack.c.l.b16 %v1686
        %v1719 = vunpack.c.l.b16 %v1687
        %v1720 = vunpack.c.l.b16 %v1688
        %v1721 = vunpack.c.l.b16 %v1689
        %v1722 = vunpack.c.l.b16 %v1690
        %v1723 = vunpack.c.l.b16 %v1691
        %v1724 = vpack.c.b16 %v1709, %v1708
        %v1725 = vpack.c.b16 %v1711, %v1710
        %v1726 = vpack.c.b16 %v1713, %v1712
        %v1727 = vpack.c.b16 %v1715, %v1714
        %v1728 = vpack.c.b16 %v1717, %v1716
        %v1729 = vpack.c.b16 %v1719, %v1718
        %v1730 = vpack.c.b16 %v1721, %v1720
        %v1731 = vpack.c.b16 %v1723, %v1722
        %1740 = vmatpush.bf16.msra.mxu0 %v1675
        %1741 = vmatpush.bf16.msra.mxu0 %v1674
        %1742 = vmatpush.bf16.msra.mxu0 %v1673
        %1743 = vmatpush.bf16.msra.mxu0 %v1672
        %1744 = vmatpush.bf16.msra.mxu0 %v1671
        %1745 = vmatpush.bf16.msra.mxu0 %v1670
        %1746 = vmatpush.bf16.msra.mxu0 %v1669
        %1747 = vmatpush.bf16.msra.mxu0 %v1668
        %1748 = vmatmul.bf16.gmra.mxu0 %v1724
        %v1749 = vpop.f32.mrf.mxu0
        %v1750 = vadd.f32 0.0, %v1749
        %v1751 = vpop.f32.mrf.mxu0
        %v1752 = vadd.f32 0.0, %v1751
        %1753 = vmatmul.bf16.gmra.mxu0 %v1725
        %v1754 = vpop.f32.mrf.mxu0
        %v1755 = vadd.f32 0.0, %v1754
        %v1756 = vpop.f32.mrf.mxu0
        %v1757 = vadd.f32 0.0, %v1756
        %1758 = vmatmul.bf16.gmra.mxu0 %v1726
        %v1759 = vpop.f32.mrf.mxu0
        %v1760 = vadd.f32 0.0, %v1759
        %v1761 = vpop.f32.mrf.mxu0
        %v1762 = vadd.f32 0.0, %v1761
        %1763 = vmatmul.bf16.gmra.mxu0 %v1727
        %v1764 = vpop.f32.mrf.mxu0
        %v1765 = vadd.f32 0.0, %v1764
        %v1766 = vpop.f32.mrf.mxu0
        %v1767 = vadd.f32 0.0, %v1766
        %1768 = vmatmul.bf16.gmra.mxu0 %v1728
        %v1769 = vpop.f32.mrf.mxu0
        %v1770 = vadd.f32 0.0, %v1769
        %v1771 = vpop.f32.mrf.mxu0
        %v1772 = vadd.f32 0.0, %v1771
        %1773 = vmatmul.bf16.gmra.mxu0 %v1729
        %v1774 = vpop.f32.mrf.mxu0
        %v1775 = vadd.f32 0.0, %v1774
        %v1776 = vpop.f32.mrf.mxu0
        %v1777 = vadd.f32 0.0, %v1776
        %1778 = vmatmul.bf16.gmra.mxu0 %v1730
        %v1779 = vpop.f32.mrf.mxu0
        %v1780 = vadd.f32 0.0, %v1779
        %v1781 = vpop.f32.mrf.mxu0
        %v1782 = vadd.f32 0.0, %v1781
        %1783 = vmatmul.bf16.gmra.mxu0 %v1731
        %v1784 = vpop.f32.mrf.mxu0
        %v1785 = vadd.f32 0.0, %v1784
        %v1786 = vpop.f32.mrf.mxu0
        %v1787 = vadd.f32 0.0, %v1786
        %1788 = vdwg.mxu0
        %v1789 = vld [vmem:[%s739] sm:$0x1]
        %v1790 = vadd.f32 %v1789, 1.0
        %v1792 = vperm.slane %v1790, 0
        %1793 = vset.pattern.permute.xlu0 0
        %1794 = vperm.xlu0 %1793, %v1792
        %v1795 = vpop.permute.xlu0 %1794
        %v1797 = vmul.f32 %v1795, %v1282
        %v1798 = vmul.f32 %v1795, %v1283
        %v1799 = vmul.f32 %v1795, %v1284
        %v1800 = vmul.f32 %v1795, %v1285
        %v1801 = vmul.f32 %v1795, %v1286
        %v1802 = vmul.f32 %v1795, %v1287
        %v1803 = vmul.f32 %v1795, %v1288
        %v1804 = vmul.f32 %v1795, %v1289
        %v1805 = vmul.f32 %v1795, %v1290
        %v1806 = vmul.f32 %v1795, %v1291
        %v1807 = vmul.f32 %v1795, %v1292
        %v1808 = vmul.f32 %v1795, %v1293
        %v1809 = vmul.f32 %v1795, %v1294
        %v1810 = vmul.f32 %v1795, %v1295
        %v1811 = vmul.f32 %v1795, %v1296
        %v1812 = vmul.f32 %v1795, %v1297
        %v1813 = vadd.f32 %v1797, %v1750
        %v1814 = vadd.f32 %v1798, %v1752
        %v1815 = vadd.f32 %v1799, %v1755
        %v1816 = vadd.f32 %v1800, %v1757
        %v1817 = vadd.f32 %v1801, %v1760
        %v1818 = vadd.f32 %v1802, %v1762
        %v1819 = vadd.f32 %v1803, %v1765
        %v1820 = vadd.f32 %v1804, %v1767
        %v1821 = vadd.f32 %v1805, %v1770
        %v1822 = vadd.f32 %v1806, %v1772
        %v1823 = vadd.f32 %v1807, %v1775
        %v1824 = vadd.f32 %v1808, %v1777
        %v1825 = vadd.f32 %v1809, %v1780
        %v1826 = vadd.f32 %v1810, %v1782
        %v1827 = vadd.f32 %v1811, %v1785
        %v1828 = vadd.f32 %v1812, %v1787
        %v1829 = vpack.c.bf16 %v1814, %v1813
        %v1830 = vpack.c.bf16 %v1816, %v1815
        %v1831 = vpack.c.bf16 %v1818, %v1817
        %v1832 = vpack.c.bf16 %v1820, %v1819
        %v1833 = vpack.c.bf16 %v1822, %v1821
        %v1834 = vpack.c.bf16 %v1824, %v1823
        %v1835 = vpack.c.bf16 %v1826, %v1825
        %v1836 = vpack.c.bf16 %v1828, %v1827
        %v1837 = vld [vmem:[%s643] sm:$0xf]
        %v1838 = vld [vmem:[%s643 + $0x4] sm:$0xf]
        %v1839 = vld [vmem:[%s643 + $0x8] sm:$0xf]
        %v1840 = vld [vmem:[%s643 + $0xc] sm:$0xf]
        %v1841 = vld [vmem:[%s643 + $0x10] sm:$0xf]
        %v1842 = vld [vmem:[%s643 + $0x14] sm:$0xf]
        %v1843 = vld [vmem:[%s643 + $0x18] sm:$0xf]
        %v1844 = vld [vmem:[%s643 + $0x1c] sm:$0xf]
        %v1845 = vld [vmem:[%s643 + $0x20] sm:$0xf]
        %v1846 = vld [vmem:[%s643 + $0x24] sm:$0xf]
        %v1847 = vld [vmem:[%s643 + $0x28] sm:$0xf]
        %v1848 = vld [vmem:[%s643 + $0x2c] sm:$0xf]
        %v1849 = vld [vmem:[%s643 + $0x30] sm:$0xf]
        %v1850 = vld [vmem:[%s643 + $0x34] sm:$0xf]
        %v1851 = vld [vmem:[%s643 + $0x38] sm:$0xf]
        %v1852 = vld [vmem:[%s643 + $0x3c] sm:$0xf]
        %v1853 = vld [vmem:[%s733] sm:$0x1]
        %v1855 = vperm.slane %v1853, 0
        %v1873 = vunpack.c.l.b16 %v1837
        %v1874 = vunpack.c.l.b16 %v1838
        %v1875 = vunpack.c.l.b16 %v1839
        %v1876 = vunpack.c.l.b16 %v1840
        %v1877 = vunpack.c.l.b16 %v1841
        %v1878 = vunpack.c.l.b16 %v1842
        %v1879 = vunpack.c.l.b16 %v1843
        %v1880 = vunpack.c.l.b16 %v1844
        %v1881 = vunpack.c.l.b16 %v1845
        %v1882 = vunpack.c.l.b16 %v1846
        %v1883 = vunpack.c.l.b16 %v1847
        %v1884 = vunpack.c.l.b16 %v1848
        %v1885 = vunpack.c.l.b16 %v1849
        %v1886 = vunpack.c.l.b16 %v1850
        %v1887 = vunpack.c.l.b16 %v1851
        %v1888 = vunpack.c.l.b16 %v1852
        %v1889 = vpack.c.b16 %v1874, %v1873
        %v1890 = vpack.c.b16 %v1876, %v1875
        %v1891 = vpack.c.b16 %v1878, %v1877
        %v1892 = vpack.c.b16 %v1880, %v1879
        %v1893 = vpack.c.b16 %v1882, %v1881
        %v1894 = vpack.c.b16 %v1884, %v1883
        %v1895 = vpack.c.b16 %v1886, %v1885
        %v1896 = vpack.c.b16 %v1888, %v1887
        %1905 = vmatpush.bf16.msra.mxu0 %v1896
        %1906 = vmatpush.bf16.msra.mxu0 %v1895
        %1907 = vmatpush.bf16.msra.mxu0 %v1894
        %1908 = vmatpush.bf16.msra.mxu0 %v1893
        %1909 = vmatpush.bf16.msra.mxu0 %v1892
        %1910 = vmatpush.bf16.msra.mxu0 %v1891
        %1911 = vmatpush.bf16.msra.mxu0 %v1890
        %1912 = vmatpush.bf16.msra.mxu0 %v1889
        %1913 = vmatmul.bf16.gmra.mxu0 %v1829
        %v1914 = vpop.f32.mrf.mxu0
        %v1915 = vadd.f32 %v1855, %v1914
        %v1916 = vpop.f32.mrf.mxu0
        %v1917 = vadd.f32 %v1855, %v1916
        %1918 = vmatmul.bf16.gmra.mxu0 %v1830
        %v1919 = vpop.f32.mrf.mxu0
        %v1920 = vadd.f32 %v1855, %v1919
        %v1921 = vpop.f32.mrf.mxu0
        %v1922 = vadd.f32 %v1855, %v1921
        %1923 = vmatmul.bf16.gmra.mxu0 %v1831
        %v1924 = vpop.f32.mrf.mxu0
        %v1925 = vadd.f32 %v1855, %v1924
        %v1926 = vpop.f32.mrf.mxu0
        %v1927 = vadd.f32 %v1855, %v1926
        %1928 = vmatmul.bf16.gmra.mxu0 %v1832
        %v1929 = vpop.f32.mrf.mxu0
        %v1930 = vadd.f32 %v1855, %v1929
        %v1931 = vpop.f32.mrf.mxu0
        %v1932 = vadd.f32 %v1855, %v1931
        %1933 = vmatmul.bf16.gmra.mxu0 %v1833
        %v1934 = vpop.f32.mrf.mxu0
        %v1935 = vadd.f32 %v1855, %v1934
        %v1936 = vpop.f32.mrf.mxu0
        %v1937 = vadd.f32 %v1855, %v1936
        %1938 = vmatmul.bf16.gmra.mxu0 %v1834
        %v1939 = vpop.f32.mrf.mxu0
        %v1940 = vadd.f32 %v1855, %v1939
        %v1941 = vpop.f32.mrf.mxu0
        %v1942 = vadd.f32 %v1855, %v1941
        %1943 = vmatmul.bf16.gmra.mxu0 %v1835
        %v1944 = vpop.f32.mrf.mxu0
        %v1945 = vadd.f32 %v1855, %v1944
        %v1946 = vpop.f32.mrf.mxu0
        %v1947 = vadd.f32 %v1855, %v1946
        %1948 = vmatmul.bf16.gmra.mxu0 %v1836
        %v1949 = vpop.f32.mrf.mxu0
        %v1950 = vadd.f32 %v1855, %v1949
        %v1951 = vpop.f32.mrf.mxu0
        %v1952 = vadd.f32 %v1855, %v1951
        %1953 = vdwg.mxu0
        %v1954 = vmax.f32 %v1915, 0.0
        %v1955 = vmax.f32 %v1917, 0.0
        %v1956 = vmax.f32 %v1920, 0.0
        %v1957 = vmax.f32 %v1922, 0.0
        %v1958 = vmax.f32 %v1925, 0.0
        %v1959 = vmax.f32 %v1927, 0.0
        %v1960 = vmax.f32 %v1930, 0.0
        %v1961 = vmax.f32 %v1932, 0.0
        %v1962 = vmax.f32 %v1935, 0.0
        %v1963 = vmax.f32 %v1937, 0.0
        %v1964 = vmax.f32 %v1940, 0.0
        %v1965 = vmax.f32 %v1942, 0.0
        %v1966 = vmax.f32 %v1945, 0.0
        %v1967 = vmax.f32 %v1947, 0.0
        %v1968 = vmax.f32 %v1950, 0.0
        %v1969 = vmax.f32 %v1952, 0.0
        %v1970 = vpack.c.bf16 %v1955, %v1954
        %v1971 = vpack.c.bf16 %v1957, %v1956
        %v1972 = vpack.c.bf16 %v1959, %v1958
        %v1973 = vpack.c.bf16 %v1961, %v1960
        %v1974 = vpack.c.bf16 %v1963, %v1962
        %v1975 = vpack.c.bf16 %v1965, %v1964
        %v1976 = vpack.c.bf16 %v1967, %v1966
        %v1977 = vpack.c.bf16 %v1969, %v1968
        %v1978 = vld [vmem:[%s653] sm:$0xf]
        %v1979 = vld [vmem:[%s653 + $0x4] sm:$0xf]
        %v1980 = vld [vmem:[%s653 + $0x8] sm:$0xf]
        %v1981 = vld [vmem:[%s653 + $0xc] sm:$0xf]
        %v1982 = vld [vmem:[%s653 + $0x10] sm:$0xf]
        %v1983 = vld [vmem:[%s653 + $0x14] sm:$0xf]
        %v1984 = vld [vmem:[%s653 + $0x18] sm:$0xf]
        %v1985 = vld [vmem:[%s653 + $0x1c] sm:$0xf]
        %v1986 = vld [vmem:[%s653 + $0x20] sm:$0xf]
        %v1987 = vld [vmem:[%s653 + $0x24] sm:$0xf]
        %v1988 = vld [vmem:[%s653 + $0x28] sm:$0xf]
        %v1989 = vld [vmem:[%s653 + $0x2c] sm:$0xf]
        %v1990 = vld [vmem:[%s653 + $0x30] sm:$0xf]
        %v1991 = vld [vmem:[%s653 + $0x34] sm:$0xf]
        %v1992 = vld [vmem:[%s653 + $0x38] sm:$0xf]
        %v1993 = vld [vmem:[%s653 + $0x3c] sm:$0xf]
        %v1994 = vld [vmem:[%s736] sm:$0x1]
        %v1996 = vperm.slane %v1994, 0
        %v2014 = vunpack.c.l.b16 %v1978
        %v2015 = vunpack.c.l.b16 %v1979
        %v2016 = vunpack.c.l.b16 %v1980
        %v2017 = vunpack.c.l.b16 %v1981
        %v2018 = vunpack.c.l.b16 %v1982
        %v2019 = vunpack.c.l.b16 %v1983
        %v2020 = vunpack.c.l.b16 %v1984
        %v2021 = vunpack.c.l.b16 %v1985
        %v2022 = vunpack.c.l.b16 %v1986
        %v2023 = vunpack.c.l.b16 %v1987
        %v2024 = vunpack.c.l.b16 %v1988
        %v2025 = vunpack.c.l.b16 %v1989
        %v2026 = vunpack.c.l.b16 %v1990
        %v2027 = vunpack.c.l.b16 %v1991
        %v2028 = vunpack.c.l.b16 %v1992
        %v2029 = vunpack.c.l.b16 %v1993
        %v2030 = vpack.c.b16 %v2015, %v2014
        %v2031 = vpack.c.b16 %v2017, %v2016
        %v2032 = vpack.c.b16 %v2019, %v2018
        %v2033 = vpack.c.b16 %v2021, %v2020
        %v2034 = vpack.c.b16 %v2023, %v2022
        %v2035 = vpack.c.b16 %v2025, %v2024
        %v2036 = vpack.c.b16 %v2027, %v2026
        %v2037 = vpack.c.b16 %v2029, %v2028
        %2046 = vmatpush.bf16.msra.mxu0 %v2037
        %2047 = vmatpush.bf16.msra.mxu0 %v2036
        %2048 = vmatpush.bf16.msra.mxu0 %v2035
        %2049 = vmatpush.bf16.msra.mxu0 %v2034
        %2050 = vmatpush.bf16.msra.mxu0 %v2033
        %2051 = vmatpush.bf16.msra.mxu0 %v2032
        %2052 = vmatpush.bf16.msra.mxu0 %v2031
        %2053 = vmatpush.bf16.msra.mxu0 %v2030
        %2054 = vmatmul.bf16.gmra.mxu0 %v1970
        %v2055 = vpop.f32.mrf.mxu0
        %v2056 = vadd.f32 %v1996, %v2055
        %v2057 = vpop.f32.mrf.mxu0
        %v2058 = vadd.f32 %v1996, %v2057
        %2059 = vmatmul.bf16.gmra.mxu0 %v1971
        %v2060 = vpop.f32.mrf.mxu0
        %v2061 = vadd.f32 %v1996, %v2060
        %v2062 = vpop.f32.mrf.mxu0
        %v2063 = vadd.f32 %v1996, %v2062
        %2064 = vmatmul.bf16.gmra.mxu0 %v1972
        %v2065 = vpop.f32.mrf.mxu0
        %v2066 = vadd.f32 %v1996, %v2065
        %v2067 = vpop.f32.mrf.mxu0
        %v2068 = vadd.f32 %v1996, %v2067
        %2069 = vmatmul.bf16.gmra.mxu0 %v1973
        %v2070 = vpop.f32.mrf.mxu0
        %v2071 = vadd.f32 %v1996, %v2070
        %v2072 = vpop.f32.mrf.mxu0
        %v2073 = vadd.f32 %v1996, %v2072
        %2074 = vmatmul.bf16.gmra.mxu0 %v1974
        %v2075 = vpop.f32.mrf.mxu0
        %v2076 = vadd.f32 %v1996, %v2075
        %v2077 = vpop.f32.mrf.mxu0
        %v2078 = vadd.f32 %v1996, %v2077
        %2079 = vmatmul.bf16.gmra.mxu0 %v1975
        %v2080 = vpop.f32.mrf.mxu0
        %v2081 = vadd.f32 %v1996, %v2080
        %v2082 = vpop.f32.mrf.mxu0
        %v2083 = vadd.f32 %v1996, %v2082
        %2084 = vmatmul.bf16.gmra.mxu0 %v1976
        %v2085 = vpop.f32.mrf.mxu0
        %v2086 = vadd.f32 %v1996, %v2085
        %v2087 = vpop.f32.mrf.mxu0
        %v2088 = vadd.f32 %v1996, %v2087
        %2089 = vmatmul.bf16.gmra.mxu0 %v1977
        %v2090 = vpop.f32.mrf.mxu0
        %v2091 = vadd.f32 %v1996, %v2090
        %v2092 = vpop.f32.mrf.mxu0
        %v2093 = vadd.f32 %v1996, %v2092
        %2094 = vdwg.mxu0
        %p2095 = scmp.ne.s32.totalorder %s37, 1
        // Predicated region
        $region117: #{tpu_custom_call.1} parent=91 // pred_check
          %p2096 = pneg %p2095
        $region118: #{tpu_custom_call.1} parent=91 // pred_check_branch
          %2098 = sbr.rel (%p2096) target = $region120
        $region119: #{tpu_custom_call.1} parent=91 // pred_region
          %v2099 = vmax.f32 %v2056, 0.0
          %v2100 = vmax.f32 %v2058, 0.0
          %v2101 = vmax.f32 %v2061, 0.0
          %v2102 = vmax.f32 %v2063, 0.0
          %v2103 = vmax.f32 %v2066, 0.0
          %v2104 = vmax.f32 %v2068, 0.0
          %v2105 = vmax.f32 %v2071, 0.0
          %v2106 = vmax.f32 %v2073, 0.0
          %v2107 = vmax.f32 %v2076, 0.0
          %v2108 = vmax.f32 %v2078, 0.0
          %v2109 = vmax.f32 %v2081, 0.0
          %v2110 = vmax.f32 %v2083, 0.0
          %v2111 = vmax.f32 %v2086, 0.0
          %v2112 = vmax.f32 %v2088, 0.0
          %v2113 = vmax.f32 %v2091, 0.0
          %v2114 = vmax.f32 %v2093, 0.0
          %v2115 = vadd.f32 %v2099, %v1282
          %v2116 = vadd.f32 %v2100, %v1283
          %v2117 = vadd.f32 %v2101, %v1284
          %v2118 = vadd.f32 %v2102, %v1285
          %v2119 = vadd.f32 %v2103, %v1286
          %v2120 = vadd.f32 %v2104, %v1287
          %v2121 = vadd.f32 %v2105, %v1288
          %v2122 = vadd.f32 %v2106, %v1289
          %v2123 = vadd.f32 %v2107, %v1290
          %v2124 = vadd.f32 %v2108, %v1291
          %v2125 = vadd.f32 %v2109, %v1292
          %v2126 = vadd.f32 %v2110, %v1293
          %v2127 = vadd.f32 %v2111, %v1294
          %v2128 = vadd.f32 %v2112, %v1295
          %v2129 = vadd.f32 %v2113, %v1296
          %v2130 = vadd.f32 %v2114, %v1297
          %2131 = vst [vmem:[#allocation2] sm:$0xff] %v2115
          %2132 = vst [vmem:[#allocation2 + $0x8] sm:$0xff] %v2116
          %2133 = vst [vmem:[#allocation2 + $0x10] sm:$0xff] %v2117
          %2134 = vst [vmem:[#allocation2 + $0x18] sm:$0xff] %v2118
          %2135 = vst [vmem:[#allocation2 + $0x20] sm:$0xff] %v2119
          %2136 = vst [vmem:[#allocation2 + $0x28] sm:$0xff] %v2120
          %2137 = vst [vmem:[#allocation2 + $0x30] sm:$0xff] %v2121
          %2138 = vst [vmem:[#allocation2 + $0x38] sm:$0xff] %v2122
          %2139 = vst [vmem:[#allocation2 + $0x40] sm:$0xff] %v2123
          %2140 = vst [vmem:[#allocation2 + $0x48] sm:$0xff] %v2124
          %2141 = vst [vmem:[#allocation2 + $0x50] sm:$0xff] %v2125
          %2142 = vst [vmem:[#allocation2 + $0x58] sm:$0xff] %v2126
          %2143 = vst [vmem:[#allocation2 + $0x60] sm:$0xff] %v2127
          %2144 = vst [vmem:[#allocation2 + $0x68] sm:$0xff] %v2128
          %2145 = vst [vmem:[#allocation2 + $0x70] sm:$0xff] %v2129
          %2146 = vst [vmem:[#allocation2 + $0x78] sm:$0xff] %v2130
          %v2147 = vpack.c.bf16 %v2115, %v2115
          %v2148 = vpack.c.bf16 %v2116, %v2116
          %v2149 = vpack.c.bf16 %v2117, %v2117
          %v2150 = vpack.c.bf16 %v2118, %v2118
          %v2151 = vpack.c.bf16 %v2119, %v2119
          %v2152 = vpack.c.bf16 %v2120, %v2120
          %v2153 = vpack.c.bf16 %v2121, %v2121
          %v2154 = vpack.c.bf16 %v2122, %v2122
          %v2155 = vpack.c.bf16 %v2123, %v2123
          %v2156 = vpack.c.bf16 %v2124, %v2124
          %v2157 = vpack.c.bf16 %v2125, %v2125
          %v2158 = vpack.c.bf16 %v2126, %v2126
          %v2159 = vpack.c.bf16 %v2127, %v2127
          %v2160 = vpack.c.bf16 %v2128, %v2128
          %v2161 = vpack.c.bf16 %v2129, %v2129
          %v2162 = vpack.c.bf16 %v2130, %v2130
          %2163 = vst [vmem:[#allocation3] sm:$0xf] %v2147
          %2164 = vst [vmem:[#allocation3 + $0x4] sm:$0xf] %v2148
          %2165 = vst [vmem:[#allocation3 + $0x8] sm:$0xf] %v2149
          %2166 = vst [vmem:[#allocation3 + $0xc] sm:$0xf] %v2150
          %2167 = vst [vmem:[#allocation3 + $0x10] sm:$0xf] %v2151
          %2168 = vst [vmem:[#allocation3 + $0x14] sm:$0xf] %v2152
          %2169 = vst [vmem:[#allocation3 + $0x18] sm:$0xf] %v2153
          %2170 = vst [vmem:[#allocation3 + $0x1c] sm:$0xf] %v2154
          %2171 = vst [vmem:[#allocation3 + $0x20] sm:$0xf] %v2155
          %2172 = vst [vmem:[#allocation3 + $0x24] sm:$0xf] %v2156
          %2173 = vst [vmem:[#allocation3 + $0x28] sm:$0xf] %v2157
          %2174 = vst [vmem:[#allocation3 + $0x2c] sm:$0xf] %v2158
          %2175 = vst [vmem:[#allocation3 + $0x30] sm:$0xf] %v2159
          %2176 = vst [vmem:[#allocation3 + $0x34] sm:$0xf] %v2160
          %2177 = vst [vmem:[#allocation3 + $0x38] sm:$0xf] %v2161
          %2178 = vst [vmem:[#allocation3 + $0x3c] sm:$0xf] %v2162
        $region120: #{tpu_custom_call.1} parent=91 // pred_fallthru
          _
        %p2179 = scmp.eq.s32.totalorder %s37, 1
        // Predicated region
        $region121: #{tpu_custom_call.1} parent=91 // pred_check
          %p2180 = pneg %p2179
        $region122: #{tpu_custom_call.1} parent=91 // pred_check_branch
          %2182 = sbr.rel (%p2180) target = $region124
        $region123: #{tpu_custom_call.1} parent=91 // pred_region
          %v2183 = vadd.f32 %v2056, %v1282
          %v2184 = vadd.f32 %v2058, %v1283
          %v2185 = vadd.f32 %v2061, %v1284
          %v2186 = vadd.f32 %v2063, %v1285
          %v2187 = vadd.f32 %v2066, %v1286
          %v2188 = vadd.f32 %v2068, %v1287
          %v2189 = vadd.f32 %v2071, %v1288
          %v2190 = vadd.f32 %v2073, %v1289
          %v2191 = vadd.f32 %v2076, %v1290
          %v2192 = vadd.f32 %v2078, %v1291
          %v2193 = vadd.f32 %v2081, %v1292
          %v2194 = vadd.f32 %v2083, %v1293
          %v2195 = vadd.f32 %v2086, %v1294
          %v2196 = vadd.f32 %v2088, %v1295
          %v2197 = vadd.f32 %v2091, %v1296
          %v2198 = vadd.f32 %v2093, %v1297
          %v2199 = vld [vmem:[%s12] sm:$0x1]
          %v2200 = vpack.c.bf16 %v2184, %v2183
          %v2201 = vpack.c.bf16 %v2186, %v2185
          %v2202 = vpack.c.bf16 %v2188, %v2187
          %v2203 = vpack.c.bf16 %v2190, %v2189
          %v2204 = vpack.c.bf16 %v2192, %v2191
          %v2205 = vpack.c.bf16 %v2194, %v2193
          %v2206 = vpack.c.bf16 %v2196, %v2195
          %v2207 = vpack.c.bf16 %v2198, %v2197
          %2208 = vmatpush.bf16.msra.mxu0 %v2207
          %2209 = vmatpush.bf16.msra.mxu0 %v2206
          %2210 = vmatpush.bf16.msra.mxu0 %v2205
          %2211 = vmatpush.bf16.msra.mxu0 %v2204
          %2212 = vmatpush.bf16.msra.mxu0 %v2203
          %2213 = vmatpush.bf16.msra.mxu0 %v2202
          %2214 = vmatpush.bf16.msra.mxu0 %v2201
          %2215 = vmatpush.bf16.msra.mxu0 %v2200
          %2216 = vmatmul.bf16.gmra.mxu0 %v2199
          %v2217 = vpop.f32.mrf.mxu0
          %v2218 = vadd.f32 0.0, %v2217
          %v2219 = vpop.f32.mrf.mxu0
          %2220 = vdwg.mxu0
          %v2221 = vld [vmem:[%s13] sm:$0x3]
          %2223 = vset.pattern.permute.xlu0 0
          %2224 = vperm.xlu0 %2223, %v2221
          %v2225 = vpop.permute.xlu0 %2224
          %v2227 = vmul.f32 %v2218, %v2225
          %v2228 = vpack.c.bf16 %v2227, %v2227
          %v2229 = vld [vmem:[#allocation13] sm:$0xf]
          %v2230 = vld [vmem:[#allocation13 + $0x4] sm:$0xf]
          %v2231 = vld [vmem:[#allocation13 + $0x8] sm:$0xf]
          %v2232 = vld [vmem:[#allocation13 + $0xc] sm:$0xf]
          %v2233 = vld [vmem:[#allocation13 + $0x10] sm:$0xf]
          %v2234 = vld [vmem:[#allocation13 + $0x14] sm:$0xf]
          %v2235 = vld [vmem:[#allocation13 + $0x18] sm:$0xf]
          %v2236 = vld [vmem:[#allocation13 + $0x1c] sm:$0xf]
          %v2237 = vld [vmem:[#allocation13 + $0x20] sm:$0xf]
          %v2238 = vld [vmem:[#allocation13 + $0x24] sm:$0xf]
          %v2239 = vld [vmem:[#allocation13 + $0x28] sm:$0xf]
          %v2240 = vld [vmem:[#allocation13 + $0x2c] sm:$0xf]
          %v2241 = vld [vmem:[#allocation13 + $0x30] sm:$0xf]
          %v2242 = vld [vmem:[#allocation13 + $0x34] sm:$0xf]
          %v2243 = vld [vmem:[#allocation13 + $0x38] sm:$0xf]
          %v2244 = vld [vmem:[#allocation13 + $0x3c] sm:$0xf]
          %v2245 = vld [vmem:[%s15] sm:$0x1]
          %v2247 = vperm.slane %v2245, 0
          %v2265 = vunpack.c.l.b16 %v2229
          %v2266 = vunpack.c.l.b16 %v2230
          %v2267 = vunpack.c.l.b16 %v2231
          %v2268 = vunpack.c.l.b16 %v2232
          %v2269 = vunpack.c.l.b16 %v2233
          %v2270 = vunpack.c.l.b16 %v2234
          %v2271 = vunpack.c.l.b16 %v2235
          %v2272 = vunpack.c.l.b16 %v2236
          %v2273 = vunpack.c.l.b16 %v2237
          %v2274 = vunpack.c.l.b16 %v2238
          %v2275 = vunpack.c.l.b16 %v2239
          %v2276 = vunpack.c.l.b16 %v2240
          %v2277 = vunpack.c.l.b16 %v2241
          %v2278 = vunpack.c.l.b16 %v2242
          %v2279 = vunpack.c.l.b16 %v2243
          %v2280 = vunpack.c.l.b16 %v2244
          %v2281 = vpack.c.b16 %v2266, %v2265
          %v2282 = vpack.c.b16 %v2268, %v2267
          %v2283 = vpack.c.b16 %v2270, %v2269
          %v2284 = vpack.c.b16 %v2272, %v2271
          %v2285 = vpack.c.b16 %v2274, %v2273
          %v2286 = vpack.c.b16 %v2276, %v2275
          %v2287 = vpack.c.b16 %v2278, %v2277
          %v2288 = vpack.c.b16 %v2280, %v2279
          %2297 = vmatpush.bf16.msra.mxu0 %v2288
          %2298 = vmatpush.bf16.msra.mxu0 %v2287
          %2299 = vmatpush.bf16.msra.mxu0 %v2286
          %2300 = vmatpush.bf16.msra.mxu0 %v2285
          %2301 = vmatpush.bf16.msra.mxu0 %v2284
          %2302 = vmatpush.bf16.msra.mxu0 %v2283
          %2303 = vmatpush.bf16.msra.mxu0 %v2282
          %2304 = vmatpush.bf16.msra.mxu0 %v2281
          %2305 = vmatmul.bf16.gmra.mxu0 %v2228
          %v2306 = vpop.f32.mrf.mxu0
          %v2307 = vadd.f32 %v2247, %v2306
          %v2308 = vpop.f32.mrf.mxu0
          %2309 = vdwg.mxu0
          %v2310 = vmax.f32 %v2307, 0.0
          %v2311 = vpack.c.bf16 %v2310, %v2310
          %v2312 = vld [vmem:[#allocation15] sm:$0xf]
          %v2313 = vld [vmem:[#allocation15 + $0x4] sm:$0xf]
          %v2314 = vld [vmem:[#allocation15 + $0x8] sm:$0xf]
          %v2315 = vld [vmem:[#allocation15 + $0xc] sm:$0xf]
          %v2316 = vld [vmem:[#allocation15 + $0x10] sm:$0xf]
          %v2317 = vld [vmem:[#allocation15 + $0x14] sm:$0xf]
          %v2318 = vld [vmem:[#allocation15 + $0x18] sm:$0xf]
          %v2319 = vld [vmem:[#allocation15 + $0x1c] sm:$0xf]
          %v2320 = vld [vmem:[#allocation15 + $0x20] sm:$0xf]
          %v2321 = vld [vmem:[#allocation15 + $0x24] sm:$0xf]
          %v2322 = vld [vmem:[#allocation15 + $0x28] sm:$0xf]
          %v2323 = vld [vmem:[#allocation15 + $0x2c] sm:$0xf]
          %v2324 = vld [vmem:[#allocation15 + $0x30] sm:$0xf]
          %v2325 = vld [vmem:[#allocation15 + $0x34] sm:$0xf]
          %v2326 = vld [vmem:[#allocation15 + $0x38] sm:$0xf]
          %v2327 = vld [vmem:[#allocation15 + $0x3c] sm:$0xf]
          %v2328 = vld [vmem:[%s17] sm:$0x1]
          %v2330 = vperm.slane %v2328, 0
          %v2348 = vunpack.c.l.b16 %v2312
          %v2349 = vunpack.c.l.b16 %v2313
          %v2350 = vunpack.c.l.b16 %v2314
          %v2351 = vunpack.c.l.b16 %v2315
          %v2352 = vunpack.c.l.b16 %v2316
          %v2353 = vunpack.c.l.b16 %v2317
          %v2354 = vunpack.c.l.b16 %v2318
          %v2355 = vunpack.c.l.b16 %v2319
          %v2356 = vunpack.c.l.b16 %v2320
          %v2357 = vunpack.c.l.b16 %v2321
          %v2358 = vunpack.c.l.b16 %v2322
          %v2359 = vunpack.c.l.b16 %v2323
          %v2360 = vunpack.c.l.b16 %v2324
          %v2361 = vunpack.c.l.b16 %v2325
          %v2362 = vunpack.c.l.b16 %v2326
          %v2363 = vunpack.c.l.b16 %v2327
          %v2364 = vpack.c.b16 %v2349, %v2348
          %v2365 = vpack.c.b16 %v2351, %v2350
          %v2366 = vpack.c.b16 %v2353, %v2352
          %v2367 = vpack.c.b16 %v2355, %v2354
          %v2368 = vpack.c.b16 %v2357, %v2356
          %v2369 = vpack.c.b16 %v2359, %v2358
          %v2370 = vpack.c.b16 %v2361, %v2360
          %v2371 = vpack.c.b16 %v2363, %v2362
          %2380 = vmatpush.bf16.msra.mxu0 %v2371
          %2381 = vmatpush.bf16.msra.mxu0 %v2370
          %2382 = vmatpush.bf16.msra.mxu0 %v2369
          %2383 = vmatpush.bf16.msra.mxu0 %v2368
          %2384 = vmatpush.bf16.msra.mxu0 %v2367
          %2385 = vmatpush.bf16.msra.mxu0 %v2366
          %2386 = vmatpush.bf16.msra.mxu0 %v2365
          %2387 = vmatpush.bf16.msra.mxu0 %v2364
          %2388 = vmatmul.bf16.gmra.mxu0 %v2311
          %v2389 = vpop.f32.mrf.mxu0
          %v2390 = vadd.f32 %v2330, %v2389
          %v2391 = vpop.f32.mrf.mxu0
          %2392 = vdwg.mxu0
          %2393 = vst [vmem:[#allocation16] sm:$0x3] %v2390
        $region124: #{tpu_custom_call.1} parent=91 // pred_fallthru
          _
        // Predicated region
        $region125: #{tpu_custom_call.1} parent=91 // pred_check
          %p2394 = pneg %p458
        $region126: #{tpu_custom_call.1} parent=91 // pred_check_branch
          %2396 = sbr.rel (%p2394) target = $region128
        $region127: #{tpu_custom_call.1} parent=91 // pred_region
          %2398 = vsyncadd [#allocation9], 0
          %s2400 = sshll.u32 [#allocation16], 4
          %s2401 = int_to_ptr.vmem [resolvable:$true] %s2400
          %s2402 = sshll.u32 %s18, 4
          %s2403 = int_to_ptr.hbm [resolvable:$true] %s2402
          %2405 = dma.vmem_to_hbm [thread:$0]  %s2401, 32, %s2403, [#allocation9]
        $region128: #{tpu_custom_call.1} parent=91 // pred_fallthru
          _
        // Predicated region
        $region129: #{tpu_custom_call.1} parent=91 // pred_check
          %p2406 = pneg %p458
        $region130: #{tpu_custom_call.1} parent=91 // pred_check_branch
          %2408 = sbr.rel (%p2406) target = $region132
        $region131: #{tpu_custom_call.1} parent=91 // pred_region
          %2410 = dma.done [#allocation9], 32
        $region132: #{tpu_custom_call.1} parent=91 // pred_fallthru
          _
      $region92: #{tpu_custom_call.1} parent=5 // pred_fallthru
        _
      %p2411 = scmp.le.s32.totalorder 2, %s32
      // Predicated region
      $region133: #{tpu_custom_call.1} parent=5 // pred_check
        %p2412 = pneg %p2411
      $region134: #{tpu_custom_call.1} parent=5 // pred_check_branch
        %2414 = sbr.rel (%p2412) target = $region136
      $region135: #{tpu_custom_call.1} parent=5 // pred_region
        %s2415 = ssub.s32 %s32, 2
      $region136: #{tpu_custom_call.1} parent=5 // pred_fallthru
        _
    $region6: #{tpu_custom_call.1} parent=1 // loop_footer
      %s36 = sadd.s32 1, %s32
    $region7: #{tpu_custom_call.1} parent=1 // loop_footer_branch
      %31 = sbr.rel target = $region3
    $region8: #{tpu_custom_call.1} parent=1 // loop_exit
      _
    %2416 = vsyncpa [#allocation8], 1
    %s2417 = scalar_lea.sflag [#allocation8], 1
    %2418 = vsyncpa %s2417, 1
    %2419 = vsyncpa [#allocation11], 1
    %s2420 = scalar_lea.sflag [#allocation11], 1
    %2421 = vsyncpa %s2420, 1
    %2422 = vsyncpa [#allocation14], 1
    %2423 = vsyncpa [#allocation9], 1
    %s2424 = scalar_lea.sflag [#allocation9], 1
    %2425 = vsyncpa %s2424, 1

</llo_original>
